<compile_context>
chip_gen: v7x
topology: tpu7x:2x2x1
jax: 0.10.0
libtpu: 0.0.40
codegen_flags: <defaults>
</compile_context>

<pallas_src>
import functools

import jax
import jax.numpy as jnp
import numpy as np
from jax.experimental import pallas as pl
from jax.experimental.pallas import tpu as pltpu


def _round_up(n, m):
    return ((n + m - 1) // m) * m


def _bilinear_matrix(out_size, in_size):
    # nn.UpsamplingBilinear2d semantics: bilinear with align_corners=True.
    M = np.zeros((out_size, in_size), dtype=np.float32)
    if in_size == 1:
        M[:, 0] = 1.0
        return M
    scale = (in_size - 1) / (out_size - 1)
    for o in range(out_size):
        s = o * scale
        i0 = min(int(np.floor(s)), in_size - 1)
        frac = s - i0
        M[o, i0] += 1.0 - frac
        if i0 + 1 < in_size:
            M[o, i0 + 1] += frac
    return M


def _tap_masks(H, W):
    # masks[t, y*W+x] == 1 iff tap (ky,kx)=divmod(t,3) reads an in-bounds pixel
    # for output position (y, x); 0 means the tap falls in the SAME zero padding.
    yy, xx = np.meshgrid(np.arange(H), np.arange(W), indexing="ij")
    yy = yy.reshape(-1)
    xx = xx.reshape(-1)
    masks = np.zeros((9, H * W), np.float32)
    for t in range(9):
        ky, kx = divmod(t, 3)
        oy, ox = ky - 1, kx - 1
        ok = (yy + oy >= 0) & (yy + oy < H) & (xx + ox >= 0) & (xx + ox < W)
        masks[t] = ok.astype(np.float32)
    return masks


def estimator_kernel(x_ref, m_ref, w1_ref, b1_ref, w2_ref, b2_ref,
                     uw_ref, mh_ref, out_ref, *, H, W):
    # x_ref  : (1, Cin_p, H*W)        channels on sublanes, spatial on lanes
    # m_ref  : (9, H*W)               0/1 border masks, one row per 3x3 tap
    # w1_ref : (WF, 9*Cin_p)          conv1 weights, taps merged into K
    # b1_ref : (WF, 1)
    # w2_ref : (Cout_p, 9*WF)         conv2 weights, taps merged into K
    # b2_ref : (Cout_p, 1)
    # uw_ref : (W, OW)                bilinear width factor (transposed)
    # mh_ref : (Cout_p*OH, H*Cout_p)  channel-blocked bilinear height factor
    # out_ref: (1, Cout_p*OH, OW)     NCHW-flat output slab for this batch elem
    N = H * W
    masks = m_ref[...]                               # hoisted: loaded once

    def taps(a):
        # Lane-axis im2col: 9 rolled + masked copies stacked along K (sublanes).
        pieces = []
        for t in range(9):
            ky, kx = divmod(t, 3)
            s = (ky - 1) * W + (kx - 1)              # static lane shift of tap
            r = a if s == 0 else pltpu.roll(a, shift=(-s) % N, axis=1)
            if s != 0:
                r = r * masks[t:t + 1, :]            # zero the padding reads
            pieces.append(r)
        return jnp.concatenate(pieces, axis=0)       # (9*C, N)

    # conv1 (3x3, SAME) + ReLU: single MXU matmul, K = 9*Cin_p.
    h = jnp.dot(w1_ref[...], taps(x_ref[0]),
                preferred_element_type=jnp.float32) + b1_ref[...]
    h = jnp.maximum(h, 0.0)                          # (WF, N)

    # conv2 (3x3, SAME): single MXU matmul, K = 9*WF.
    y = jnp.dot(w2_ref[...], taps(h),
                preferred_element_type=jnp.float32) + b2_ref[...]   # (Cout_p, N)

    # Separable bilinear x4 upsample (align_corners=True), two matmuls.
    # Width pass: rebuild rows in (h, c) order with cheap sublane-aligned concat.
    rows = jnp.concatenate([y[:, r * W:(r + 1) * W] for r in range(H)], axis=0)
    zw = jnp.dot(rows, uw_ref[...],
                 preferred_element_type=jnp.float32)                # (H*Cout_p, OW)
    # Height pass: channel-blocked Uh maps rows (h, c) -> (c, oh) => NCHW order.
    out_ref[0] = jnp.dot(mh_ref[...], zw, preferred_element_type=jnp.float32)


def estimator_forward(x_nchw, w1, b1, w2, b2, scale=4):
    B, Cin, H, W = x_nchw.shape
    WF = w1.shape[-1]
    Cout = w2.shape[-1]
    OH, OW = scale * H, scale * W
    N = H * W

    # Pad channel counts to sublane-friendly multiples of 8 (zero rows are inert).
    Cin_p = _round_up(Cin, 8)
    Cout_p = _round_up(Cout, 8)

    # NCHW is already channels-on-sublanes / spatial-on-lanes: just flatten HxW.
    x = jnp.pad(x_nchw.astype(jnp.float32).reshape(B, Cin, N),
                ((0, 0), (0, Cin_p - Cin), (0, 0)))

    # Conv weights with taps merged into the K dim, matching taps() (ky, kx, ci).
    w1m = jnp.transpose(w1.astype(jnp.float32), (3, 0, 1, 2))        # (WF,3,3,Cin)
    w1m = jnp.pad(w1m, ((0, 0), (0, 0), (0, 0), (0, Cin_p - Cin)))
    w1m = w1m.reshape(WF, 9 * Cin_p)
    w2m = jnp.transpose(w2.astype(jnp.float32), (3, 0, 1, 2))        # (Cout,3,3,WF)
    w2m = w2m.reshape(Cout, 9 * WF)
    w2m = jnp.pad(w2m, ((0, Cout_p - Cout), (0, 0)))
    b1m = b1.astype(jnp.float32).reshape(WF, 1)
    b2m = jnp.pad(b2.astype(jnp.float32), ((0, Cout_p - Cout),)).reshape(Cout_p, 1)

    # Separable bilinear factors (align_corners=True).  The height factor is
    # expanded per (padded) output channel so the final matmul's rows come out
    # directly in NCHW order: row c*OH + oh, column ow.
    uh = _bilinear_matrix(OH, H)                         # (OH, H)
    uw = _bilinear_matrix(OW, W)                         # (OW, W)
    uwT = jnp.asarray(uw.T)                              # (W, OW)
    mh_np = np.zeros((Cout_p * OH, H * Cout_p), np.float32)
    for c in range(Cout_p):
        mh_np[c * OH:(c + 1) * OH, c::Cout_p] = uh
    mh = jnp.asarray(mh_np)

    masks = jnp.asarray(_tap_masks(H, W))                # (9, N)

    kernel = functools.partial(estimator_kernel, H=H, W=W)

    # NOTE(v7x): for B == 1 a second parallel grid axis over output-row tiles
    # would keep both TensorCores busy; omitted at this problem size.
    out_flat = pl.pallas_call(
        kernel,
        out_shape=jax.ShapeDtypeStruct((B, Cout_p * OH, OW), jnp.float32),
        grid_spec=pltpu.PrefetchScalarGridSpec(
            num_scalar_prefetch=0,
            grid=(B,),
            in_specs=[
                pl.BlockSpec((1, Cin_p, N), lambda b: (b, 0, 0)),
                # grid-invariant operands (constant index_map => fetched once):
                pl.BlockSpec((9, N), lambda b: (0, 0)),
                pl.BlockSpec((WF, 9 * Cin_p), lambda b: (0, 0)),
                pl.BlockSpec((WF, 1), lambda b: (0, 0)),
                pl.BlockSpec((Cout_p, 9 * WF), lambda b: (0, 0)),
                pl.BlockSpec((Cout_p, 1), lambda b: (0, 0)),
                pl.BlockSpec((W, OW), lambda b: (0, 0)),
                pl.BlockSpec((Cout_p * OH, H * Cout_p), lambda b: (0, 0)),
            ],
            out_specs=pl.BlockSpec((1, Cout_p * OH, OW), lambda b: (b, 0, 0)),
        ),
        compiler_params=pltpu.CompilerParams(
            dimension_semantics=("parallel",)),
    )(x, masks, w1m, b1m, w2m, b2m, uwT, mh)

    # Output is NCHW-flat already: free reshape + channel slice, no transpose.
    return out_flat.reshape(B, Cout_p, OH, OW)[:, :Cout]


def estimator_reference(x_nchw, w1, b1, w2, b2, scale=4):
    # Pure-JAX reference (same semantics) for a correctness check.
    x = jnp.transpose(x_nchw, (0, 2, 3, 1)).astype(jnp.float32)
    dn = ('NHWC', 'HWIO', 'NHWC')
    h = jax.lax.conv_general_dilated(x, w1, (1, 1), 'SAME',
                                     dimension_numbers=dn) + b1
    h = jnp.maximum(h, 0.0)
    y = jax.lax.conv_general_dilated(h, w2, (1, 1), 'SAME',
                                     dimension_numbers=dn) + b2
    B, H, W, C = y.shape
    uh = jnp.asarray(_bilinear_matrix(scale * H, H))
    uw = jnp.asarray(_bilinear_matrix(scale * W, W))
    out = jnp.einsum('oh,pw,bhwc->bopc', uh, uw, y)
    return jnp.transpose(out, (0, 3, 1, 2))


if __name__ == "__main__":
    B, in_ch, out_ch, wf, H, W = 2, 4, 3, 32, 16, 16

    key = jax.random.PRNGKey(0)
    k = jax.random.split(key, 5)
    x = jax.random.normal(k[0], (B, in_ch, H, W), jnp.float32)

    # Deterministic, PyTorch-default-style fan-in uniform init (HWIO layout).
    lim1 = 1.0 / np.sqrt(in_ch * 9)
    lim2 = 1.0 / np.sqrt(wf * 9)
    w1 = jax.random.uniform(k[1], (3, 3, in_ch, wf), jnp.float32, -lim1, lim1)
    b1 = jax.random.uniform(k[2], (wf,), jnp.float32, -lim1, lim1)
    w2 = jax.random.uniform(k[3], (3, 3, wf, out_ch), jnp.float32, -lim2, lim2)
    b2 = jax.random.uniform(k[4], (out_ch,), jnp.float32, -lim2, lim2)

    out = estimator_forward(x, w1, b1, w2, b2)
    out = jax.block_until_ready(out)

    ref = estimator_reference(x, w1, b1, w2, b2)
    assert out.shape == (B, out_ch, 4 * H, 4 * W), out.shape
    err = float(jnp.max(jnp.abs(out - ref)))
    assert err < 1e-3, f"max abs err {err}"
    print("KERNEL_OK")
</pallas_src>

<mosaic_0001>
module attributes {stable_mosaic.version = 11 : i64} {
  func.func @estimator_kernel(%arg0: i32, %arg1: memref<1x8x256xf32, #tpu.memory_space<vmem>>, %arg2: memref<9x256xf32, #tpu.memory_space<vmem>>, %arg3: memref<32x72xf32, #tpu.memory_space<vmem>>, %arg4: memref<32x1xf32, #tpu.memory_space<vmem>>, %arg5: memref<8x288xf32, #tpu.memory_space<vmem>>, %arg6: memref<8x1xf32, #tpu.memory_space<vmem>>, %arg7: memref<16x64xf32, #tpu.memory_space<vmem>>, %arg8: memref<512x128xf32, #tpu.memory_space<vmem>>, %arg9: memref<1x512x64xf32, #tpu.memory_space<vmem>>) attributes {dimension_semantics = [#tpu.dimension_semantics<parallel>], iteration_bounds = array<i64: 2>, scalar_prefetch = 0 : i64, scratch_operands = 0 : i64, tpu.core_type = #tpu.core_type<tc>, window_params = [{transform_indices = @transform_0, window_bounds = array<i64: 1, 8, 256>}, {pipeline_mode = #tpu.pipeline_mode<synchronous>, transform_indices = @transform_1, window_bounds = array<i64: 9, 256>}, {pipeline_mode = #tpu.pipeline_mode<synchronous>, transform_indices = @transform_2, window_bounds = array<i64: 32, 72>}, {pipeline_mode = #tpu.pipeline_mode<synchronous>, transform_indices = @transform_3, window_bounds = array<i64: 32, 1>}, {pipeline_mode = #tpu.pipeline_mode<synchronous>, transform_indices = @transform_4, window_bounds = array<i64: 8, 288>}, {pipeline_mode = #tpu.pipeline_mode<synchronous>, transform_indices = @transform_5, window_bounds = array<i64: 8, 1>}, {pipeline_mode = #tpu.pipeline_mode<synchronous>, transform_indices = @transform_6, window_bounds = array<i64: 16, 64>}, {pipeline_mode = #tpu.pipeline_mode<synchronous>, transform_indices = @transform_7, window_bounds = array<i64: 512, 128>}, {transform_indices = @transform_8, window_bounds = array<i64: 1, 512, 64>}]} {
    %c0 = arith.constant 0 : index
    %c0_0 = arith.constant 0 : index
    %0 = vector.load %arg2[%c0, %c0_0] : memref<9x256xf32, #tpu.memory_space<vmem>>, vector<9x256xf32>
    %c0_1 = arith.constant 0 : index
    %c0_2 = arith.constant 0 : index
    %1 = vector.load %arg3[%c0_1, %c0_2] : memref<32x72xf32, #tpu.memory_space<vmem>>, vector<32x72xf32>
    %c0_3 = arith.constant 0 : index
    %c0_4 = arith.constant 0 : index
    %c0_5 = arith.constant 0 : index
    %2 = vector.load %arg1[%c0_3, %c0_4, %c0_5] : memref<1x8x256xf32, #tpu.memory_space<vmem>>, vector<1x8x256xf32>
    %3 = vector.shape_cast %2 : vector<1x8x256xf32> to vector<8x256xf32>
    %c17_i32 = arith.constant 17 : i32
    %4 = tpu.dynamic_rotate %3 by %c17_i32 dim 1 : vector<8x256xf32>, i32 -> vector<8x256xf32>
    %5 = vector.extract_strided_slice %0 {offsets = [0, 0], sizes = [1, 256], strides = [1, 1]} : vector<9x256xf32> to vector<1x256xf32>
    %6 = vector.broadcast %5 : vector<1x256xf32> to vector<8x256xf32>
    %7 = arith.mulf %4, %6 : vector<8x256xf32>
    %c16_i32 = arith.constant 16 : i32
    %8 = tpu.dynamic_rotate %3 by %c16_i32 dim 1 : vector<8x256xf32>, i32 -> vector<8x256xf32>
    %9 = vector.extract_strided_slice %0 {offsets = [1, 0], sizes = [1, 256], strides = [1, 1]} : vector<9x256xf32> to vector<1x256xf32>
    %10 = vector.broadcast %9 : vector<1x256xf32> to vector<8x256xf32>
    %11 = arith.mulf %8, %10 : vector<8x256xf32>
    %c15_i32 = arith.constant 15 : i32
    %12 = tpu.dynamic_rotate %3 by %c15_i32 dim 1 : vector<8x256xf32>, i32 -> vector<8x256xf32>
    %13 = vector.extract_strided_slice %0 {offsets = [2, 0], sizes = [1, 256], strides = [1, 1]} : vector<9x256xf32> to vector<1x256xf32>
    %14 = vector.broadcast %13 : vector<1x256xf32> to vector<8x256xf32>
    %15 = arith.mulf %12, %14 : vector<8x256xf32>
    %c1_i32 = arith.constant 1 : i32
    %16 = tpu.dynamic_rotate %3 by %c1_i32 dim 1 : vector<8x256xf32>, i32 -> vector<8x256xf32>
    %17 = vector.extract_strided_slice %0 {offsets = [3, 0], sizes = [1, 256], strides = [1, 1]} : vector<9x256xf32> to vector<1x256xf32>
    %18 = vector.broadcast %17 : vector<1x256xf32> to vector<8x256xf32>
    %19 = arith.mulf %16, %18 : vector<8x256xf32>
    %c255_i32 = arith.constant 255 : i32
    %20 = tpu.dynamic_rotate %3 by %c255_i32 dim 1 : vector<8x256xf32>, i32 -> vector<8x256xf32>
    %21 = vector.extract_strided_slice %0 {offsets = [5, 0], sizes = [1, 256], strides = [1, 1]} : vector<9x256xf32> to vector<1x256xf32>
    %22 = vector.broadcast %21 : vector<1x256xf32> to vector<8x256xf32>
    %23 = arith.mulf %20, %22 : vector<8x256xf32>
    %c241_i32 = arith.constant 241 : i32
    %24 = tpu.dynamic_rotate %3 by %c241_i32 dim 1 : vector<8x256xf32>, i32 -> vector<8x256xf32>
    %25 = vector.extract_strided_slice %0 {offsets = [6, 0], sizes = [1, 256], strides = [1, 1]} : vector<9x256xf32> to vector<1x256xf32>
    %26 = vector.broadcast %25 : vector<1x256xf32> to vector<8x256xf32>
    %27 = arith.mulf %24, %26 : vector<8x256xf32>
    %c240_i32 = arith.constant 240 : i32
    %28 = tpu.dynamic_rotate %3 by %c240_i32 dim 1 : vector<8x256xf32>, i32 -> vector<8x256xf32>
    %29 = vector.extract_strided_slice %0 {offsets = [7, 0], sizes = [1, 256], strides = [1, 1]} : vector<9x256xf32> to vector<1x256xf32>
    %30 = vector.broadcast %29 : vector<1x256xf32> to vector<8x256xf32>
    %31 = arith.mulf %28, %30 : vector<8x256xf32>
    %c239_i32 = arith.constant 239 : i32
    %32 = tpu.dynamic_rotate %3 by %c239_i32 dim 1 : vector<8x256xf32>, i32 -> vector<8x256xf32>
    %33 = vector.extract_strided_slice %0 {offsets = [8, 0], sizes = [1, 256], strides = [1, 1]} : vector<9x256xf32> to vector<1x256xf32>
    %34 = vector.broadcast %33 : vector<1x256xf32> to vector<8x256xf32>
    %35 = arith.mulf %32, %34 : vector<8x256xf32>
    %36 = tpu.concatenate %7, %11, %15, %19, %3, %23, %27, %31, %35 in 0 : vector<8x256xf32>, vector<8x256xf32>, vector<8x256xf32>, vector<8x256xf32>, vector<8x256xf32>, vector<8x256xf32>, vector<8x256xf32>, vector<8x256xf32>, vector<8x256xf32> -> vector<72x256xf32>
    %cst = arith.constant dense<0.000000e+00> : vector<32x256xf32>
    %37 = tpu.matmul %1, %36, %cst {dimension_numbers = #tpu.dot_dimension_numbers<[1], [0], [0], [1], [0, 0, 1, 1], [], []>} : vector<32x72xf32>, vector<72x256xf32>, vector<32x256xf32> -> vector<32x256xf32>
    %c0_6 = arith.constant 0 : index
    %c0_7 = arith.constant 0 : index
    %38 = vector.load %arg4[%c0_6, %c0_7] : memref<32x1xf32, #tpu.memory_space<vmem>>, vector<32x1xf32>
    %39 = vector.broadcast %38 : vector<32x1xf32> to vector<32x256xf32>
    %40 = arith.addf %37, %39 : vector<32x256xf32>
    %cst_8 = arith.constant 0.000000e+00 : f32
    %41 = vector.broadcast %cst_8 : f32 to vector<32x256xf32>
    %42 = arith.maximumf %40, %41 : vector<32x256xf32>
    %c0_9 = arith.constant 0 : index
    %c0_10 = arith.constant 0 : index
    %43 = vector.load %arg5[%c0_9, %c0_10] : memref<8x288xf32, #tpu.memory_space<vmem>>, vector<8x288xf32>
    %c17_i32_11 = arith.constant 17 : i32
    %44 = tpu.dynamic_rotate %42 by %c17_i32_11 dim 1 : vector<32x256xf32>, i32 -> vector<32x256xf32>
    %45 = vector.extract_strided_slice %0 {offsets = [0, 0], sizes = [1, 256], strides = [1, 1]} : vector<9x256xf32> to vector<1x256xf32>
    %46 = vector.broadcast %45 : vector<1x256xf32> to vector<32x256xf32>
    %47 = arith.mulf %44, %46 : vector<32x256xf32>
    %c16_i32_12 = arith.constant 16 : i32
    %48 = tpu.dynamic_rotate %42 by %c16_i32_12 dim 1 : vector<32x256xf32>, i32 -> vector<32x256xf32>
    %49 = vector.extract_strided_slice %0 {offsets = [1, 0], sizes = [1, 256], strides = [1, 1]} : vector<9x256xf32> to vector<1x256xf32>
    %50 = vector.broadcast %49 : vector<1x256xf32> to vector<32x256xf32>
    %51 = arith.mulf %48, %50 : vector<32x256xf32>
    %c15_i32_13 = arith.constant 15 : i32
    %52 = tpu.dynamic_rotate %42 by %c15_i32_13 dim 1 : vector<32x256xf32>, i32 -> vector<32x256xf32>
    %53 = vector.extract_strided_slice %0 {offsets = [2, 0], sizes = [1, 256], strides = [1, 1]} : vector<9x256xf32> to vector<1x256xf32>
    %54 = vector.broadcast %53 : vector<1x256xf32> to vector<32x256xf32>
    %55 = arith.mulf %52, %54 : vector<32x256xf32>
    %c1_i32_14 = arith.constant 1 : i32
    %56 = tpu.dynamic_rotate %42 by %c1_i32_14 dim 1 : vector<32x256xf32>, i32 -> vector<32x256xf32>
    %57 = vector.extract_strided_slice %0 {offsets = [3, 0], sizes = [1, 256], strides = [1, 1]} : vector<9x256xf32> to vector<1x256xf32>
    %58 = vector.broadcast %57 : vector<1x256xf32> to vector<32x256xf32>
    %59 = arith.mulf %56, %58 : vector<32x256xf32>
    %c255_i32_15 = arith.constant 255 : i32
    %60 = tpu.dynamic_rotate %42 by %c255_i32_15 dim 1 : vector<32x256xf32>, i32 -> vector<32x256xf32>
    %61 = vector.extract_strided_slice %0 {offsets = [5, 0], sizes = [1, 256], strides = [1, 1]} : vector<9x256xf32> to vector<1x256xf32>
    %62 = vector.broadcast %61 : vector<1x256xf32> to vector<32x256xf32>
    %63 = arith.mulf %60, %62 : vector<32x256xf32>
    %c241_i32_16 = arith.constant 241 : i32
    %64 = tpu.dynamic_rotate %42 by %c241_i32_16 dim 1 : vector<32x256xf32>, i32 -> vector<32x256xf32>
    %65 = vector.extract_strided_slice %0 {offsets = [6, 0], sizes = [1, 256], strides = [1, 1]} : vector<9x256xf32> to vector<1x256xf32>
    %66 = vector.broadcast %65 : vector<1x256xf32> to vector<32x256xf32>
    %67 = arith.mulf %64, %66 : vector<32x256xf32>
    %c240_i32_17 = arith.constant 240 : i32
    %68 = tpu.dynamic_rotate %42 by %c240_i32_17 dim 1 : vector<32x256xf32>, i32 -> vector<32x256xf32>
    %69 = vector.extract_strided_slice %0 {offsets = [7, 0], sizes = [1, 256], strides = [1, 1]} : vector<9x256xf32> to vector<1x256xf32>
    %70 = vector.broadcast %69 : vector<1x256xf32> to vector<32x256xf32>
    %71 = arith.mulf %68, %70 : vector<32x256xf32>
    %c239_i32_18 = arith.constant 239 : i32
    %72 = tpu.dynamic_rotate %42 by %c239_i32_18 dim 1 : vector<32x256xf32>, i32 -> vector<32x256xf32>
    %73 = vector.extract_strided_slice %0 {offsets = [8, 0], sizes = [1, 256], strides = [1, 1]} : vector<9x256xf32> to vector<1x256xf32>
    %74 = vector.broadcast %73 : vector<1x256xf32> to vector<32x256xf32>
    %75 = arith.mulf %72, %74 : vector<32x256xf32>
    %76 = tpu.concatenate %47, %51, %55, %59, %42, %63, %67, %71, %75 in 0 : vector<32x256xf32>, vector<32x256xf32>, vector<32x256xf32>, vector<32x256xf32>, vector<32x256xf32>, vector<32x256xf32>, vector<32x256xf32>, vector<32x256xf32>, vector<32x256xf32> -> vector<288x256xf32>
    %cst_19 = arith.constant dense<0.000000e+00> : vector<8x256xf32>
    %77 = tpu.matmul %43, %76, %cst_19 {dimension_numbers = #tpu.dot_dimension_numbers<[1], [0], [0], [1], [0, 0, 1, 1], [], []>} : vector<8x288xf32>, vector<288x256xf32>, vector<8x256xf32> -> vector<8x256xf32>
    %c0_20 = arith.constant 0 : index
    %c0_21 = arith.constant 0 : index
    %78 = vector.load %arg6[%c0_20, %c0_21] : memref<8x1xf32, #tpu.memory_space<vmem>>, vector<8x1xf32>
    %79 = vector.broadcast %78 : vector<8x1xf32> to vector<8x256xf32>
    %80 = arith.addf %77, %79 : vector<8x256xf32>
    %81 = vector.extract_strided_slice %80 {offsets = [0, 0], sizes = [8, 16], strides = [1, 1]} : vector<8x256xf32> to vector<8x16xf32>
    %82 = vector.extract_strided_slice %80 {offsets = [0, 16], sizes = [8, 16], strides = [1, 1]} : vector<8x256xf32> to vector<8x16xf32>
    %83 = vector.extract_strided_slice %80 {offsets = [0, 32], sizes = [8, 16], strides = [1, 1]} : vector<8x256xf32> to vector<8x16xf32>
    %84 = vector.extract_strided_slice %80 {offsets = [0, 48], sizes = [8, 16], strides = [1, 1]} : vector<8x256xf32> to vector<8x16xf32>
    %85 = vector.extract_strided_slice %80 {offsets = [0, 64], sizes = [8, 16], strides = [1, 1]} : vector<8x256xf32> to vector<8x16xf32>
    %86 = vector.extract_strided_slice %80 {offsets = [0, 80], sizes = [8, 16], strides = [1, 1]} : vector<8x256xf32> to vector<8x16xf32>
    %87 = vector.extract_strided_slice %80 {offsets = [0, 96], sizes = [8, 16], strides = [1, 1]} : vector<8x256xf32> to vector<8x16xf32>
    %88 = vector.extract_strided_slice %80 {offsets = [0, 112], sizes = [8, 16], strides = [1, 1]} : vector<8x256xf32> to vector<8x16xf32>
    %89 = vector.extract_strided_slice %80 {offsets = [0, 128], sizes = [8, 16], strides = [1, 1]} : vector<8x256xf32> to vector<8x16xf32>
    %90 = vector.extract_strided_slice %80 {offsets = [0, 144], sizes = [8, 16], strides = [1, 1]} : vector<8x256xf32> to vector<8x16xf32>
    %91 = vector.extract_strided_slice %80 {offsets = [0, 160], sizes = [8, 16], strides = [1, 1]} : vector<8x256xf32> to vector<8x16xf32>
    %92 = vector.extract_strided_slice %80 {offsets = [0, 176], sizes = [8, 16], strides = [1, 1]} : vector<8x256xf32> to vector<8x16xf32>
    %93 = vector.extract_strided_slice %80 {offsets = [0, 192], sizes = [8, 16], strides = [1, 1]} : vector<8x256xf32> to vector<8x16xf32>
    %94 = vector.extract_strided_slice %80 {offsets = [0, 208], sizes = [8, 16], strides = [1, 1]} : vector<8x256xf32> to vector<8x16xf32>
    %95 = vector.extract_strided_slice %80 {offsets = [0, 224], sizes = [8, 16], strides = [1, 1]} : vector<8x256xf32> to vector<8x16xf32>
    %96 = vector.extract_strided_slice %80 {offsets = [0, 240], sizes = [8, 16], strides = [1, 1]} : vector<8x256xf32> to vector<8x16xf32>
    %97 = tpu.concatenate %81, %82, %83, %84, %85, %86, %87, %88, %89, %90, %91, %92, %93, %94, %95, %96 in 0 : vector<8x16xf32>, vector<8x16xf32>, vector<8x16xf32>, vector<8x16xf32>, vector<8x16xf32>, vector<8x16xf32>, vector<8x16xf32>, vector<8x16xf32>, vector<8x16xf32>, vector<8x16xf32>, vector<8x16xf32>, vector<8x16xf32>, vector<8x16xf32>, vector<8x16xf32>, vector<8x16xf32>, vector<8x16xf32> -> vector<128x16xf32>
    %c0_22 = arith.constant 0 : index
    %c0_23 = arith.constant 0 : index
    %98 = vector.load %arg7[%c0_22, %c0_23] : memref<16x64xf32, #tpu.memory_space<vmem>>, vector<16x64xf32>
    %cst_24 = arith.constant dense<0.000000e+00> : vector<128x64xf32>
    %99 = tpu.matmul %97, %98, %cst_24 {dimension_numbers = #tpu.dot_dimension_numbers<[1], [0], [0], [1], [0, 0, 1, 1], [], []>} : vector<128x16xf32>, vector<16x64xf32>, vector<128x64xf32> -> vector<128x64xf32>
    %c0_25 = arith.constant 0 : index
    %c0_26 = arith.constant 0 : index
    %100 = vector.load %arg8[%c0_25, %c0_26] : memref<512x128xf32, #tpu.memory_space<vmem>>, vector<512x128xf32>
    %cst_27 = arith.constant dense<0.000000e+00> : vector<512x64xf32>
    %101 = tpu.matmul %100, %99, %cst_27 {dimension_numbers = #tpu.dot_dimension_numbers<[1], [0], [0], [1], [0, 0, 1, 1], [], []>} : vector<512x128xf32>, vector<128x64xf32>, vector<512x64xf32> -> vector<512x64xf32>
    %c0_28 = arith.constant 0 : index
    %c0_29 = arith.constant 0 : index
    %c0_30 = arith.constant 0 : index
    %102 = vector.load %arg9[%c0_28, %c0_29, %c0_30] : memref<1x512x64xf32, #tpu.memory_space<vmem>>, vector<1x512x64xf32>
    %103 = vector.shape_cast %102 : vector<1x512x64xf32> to vector<512x64xf32>
    %104 = vector.shape_cast %101 : vector<512x64xf32> to vector<1x512x64xf32>
    tpu.vector_store %arg9[%c0_28, %c0_29, %c0_30], %104 {strides = array<i32>} : memref<1x512x64xf32, #tpu.memory_space<vmem>>, vector<1x512x64xf32>,
    return
  }
  func.func @transform_0(%arg0: i32) -> (i32, i32, i32) {
    %c0_i32 = arith.constant 0 : i32
    %c0_i32_0 = arith.constant 0 : i32
    %c0_i32_1 = arith.constant 0 : i32
    return %arg0, %c0_i32, %c0_i32_0 : i32, i32, i32
  }
  func.func @transform_1(%arg0: i32) -> (i32, i32) {
    %c0_i32 = arith.constant 0 : i32
    %c0_i32_0 = arith.constant 0 : i32
    %c0_i32_1 = arith.constant 0 : i32
    return %c0_i32, %c0_i32_0 : i32, i32
  }
  func.func @transform_2(%arg0: i32) -> (i32, i32) {
    %c0_i32 = arith.constant 0 : i32
    %c0_i32_0 = arith.constant 0 : i32
    %c0_i32_1 = arith.constant 0 : i32
    return %c0_i32, %c0_i32_0 : i32, i32
  }
  func.func @transform_3(%arg0: i32) -> (i32, i32) {
    %c0_i32 = arith.constant 0 : i32
    %c0_i32_0 = arith.constant 0 : i32
    %c0_i32_1 = arith.constant 0 : i32
    return %c0_i32, %c0_i32_0 : i32, i32
  }
  func.func @transform_4(%arg0: i32) -> (i32, i32) {
    %c0_i32 = arith.constant 0 : i32
    %c0_i32_0 = arith.constant 0 : i32
    %c0_i32_1 = arith.constant 0 : i32
    return %c0_i32, %c0_i32_0 : i32, i32
  }
  func.func @transform_5(%arg0: i32) -> (i32, i32) {
    %c0_i32 = arith.constant 0 : i32
    %c0_i32_0 = arith.constant 0 : i32
    %c0_i32_1 = arith.constant 0 : i32
    return %c0_i32, %c0_i32_0 : i32, i32
  }
  func.func @transform_6(%arg0: i32) -> (i32, i32) {
    %c0_i32 = arith.constant 0 : i32
    %c0_i32_0 = arith.constant 0 : i32
    %c0_i32_1 = arith.constant 0 : i32
    return %c0_i32, %c0_i32_0 : i32, i32
  }
  func.func @transform_7(%arg0: i32) -> (i32, i32) {
    %c0_i32 = arith.constant 0 : i32
    %c0_i32_0 = arith.constant 0 : i32
    %c0_i32_1 = arith.constant 0 : i32
    return %c0_i32, %c0_i32_0 : i32, i32
  }
  func.func @transform_8(%arg0: i32) -> (i32, i32, i32) {
    %c0_i32 = arith.constant 0 : i32
    %c0_i32_0 = arith.constant 0 : i32
    %c0_i32_1 = arith.constant 0 : i32
    return %arg0, %c0_i32, %c0_i32_0 : i32, i32, i32
  }
}

</mosaic_0001>

<llo_original>
// kernel: tpu_custom_call.1
$region0: #{tpu_custom_call.1}
  #allocation0 [shape = 'u32[]', space=smem, size = 0x4, offset = 0x4, fixed_abs, tag = 'smem constant byte address 0x4 - core index']
  #allocation1 [shape = 'u32[144,128]{1,0:T(1,128)}', space=vmem, size = 0x12000, scoped, tag = 'internal scratch']
  %s0 = inlined_call_operand.vmem [shape: f32[2,8,256], index: 0, kind: input, shape index: {}]
  %s1 = inlined_call_operand.hbm [shape: f32[9,256], index: 1, kind: input, shape index: {}]
  %s2 = inlined_call_operand.hbm [shape: f32[32,72], index: 2, kind: input, shape index: {}]
  %s3 = inlined_call_operand.vmem [shape: f32[32,1], index: 3, kind: input, shape index: {}]
  %s4 = inlined_call_operand.vmem [shape: f32[8,288], index: 4, kind: input, shape index: {}]
  %s5 = inlined_call_operand.vmem [shape: f32[8,1], index: 5, kind: input, shape index: {}]
  %s6 = inlined_call_operand.hbm [shape: f32[16,64], index: 6, kind: input, shape index: {}]
  %s7 = inlined_call_operand.hbm [shape: f32[512,128], index: 7, kind: input, shape index: {}]
  %s8 = inlined_call_operand.vmem [shape: f32[2,512,64], index: 8, kind: output, shape index: {}]
  %s9 = sld [smem:[#allocation0]]
  $region81: #{tpu_custom_call.1} parent=0
    _
  %s11 = ssub.s32 1, %s9
  %s12 = scalar_select 0, %s11, %s9
  $region1: #{tpu_custom_call.1} parent=0
    #allocation2 [shape = 'u8[16384]{0}', space=vmem, size = 0x4000, scoped, tag = 'input window, operand 1, single buffered']
    #allocation3 [shape = 's32[2]{0}', space=sflag, size = 0x8, scoped, tag = 'scoped memory for tpu_custom_call.1']
    #allocation4 [shape = 'u8[16384]{0}', space=vmem, size = 0x4000, scoped, tag = 'input window, operand 2, single buffered']
    #allocation5 [shape = 's32[1]{0}', space=sflag, size = 0x4, scoped, tag = 'scoped memory for tpu_custom_call.1']
    #allocation6 [shape = 'u8[8192]{0}', space=vmem, size = 0x2000, scoped, tag = 'input window, operand 6, single buffered']
    #allocation7 [shape = 'u8[262144]{0}', space=vmem, size = 0x40000, scoped, tag = 'input window, operand 7, single buffered']
    #allocation8 [shape = 's32[1]{0}', space=sflag, size = 0x4, scoped, tag = 'scoped memory for tpu_custom_call.1']
    %13 = vsyncpa [#allocation3], 0
    %14 = vsyncpa [#allocation5], 0
    %15 = vsyncpa [#allocation8], 0
    loop: start=0, step=1, limit=4
    $region2: #{tpu_custom_call.1} parent=1 // loop_pre_header
      _
    $region3: #{tpu_custom_call.1} parent=1 // loop_header
      %s17 = sphi 0, %s21
      %p18 = scmp.ge.s32.totalorder %s17, 4
      %s27 = sphi 0, %s29
      %s30 = sphi 0, %s27
      %s31 = sphi 0, %s30
      %s47 = sphi 0, %s31
      %s51 = sphi 0, %s51
      %s53 = sphi 0, %s51
      %s54 = sphi 0, %s53
      %s68 = sphi 0, %s54
      %s72 = sphi 0, %s72
      %s74 = sphi 0, %s72
      %s75 = sphi 0, %s74
      %s89 = sphi 0, %s75
      %s93 = sphi 0, %s93
      %s95 = sphi 0, %s93
      %s96 = sphi 0, %s95
      %s110 = sphi 0, %s96
      %s114 = sphi 0, %s114
      %s116 = sphi 0, %s114
      %s117 = sphi 0, %s116
      %s131 = sphi 0, %s117
      %s135 = sphi 0, %s135
      %s137 = sphi 0, %s135
      %s138 = sphi 0, %s137
      %s152 = sphi 0, %s138
      %s156 = sphi 0, %s156
      %s158 = sphi 0, %s156
      %s159 = sphi 0, %s158
      %s173 = sphi 0, %s159
      %s177 = sphi 0, %s177
      %s179 = sphi 0, %s177
      %s180 = sphi 0, %s179
      %s194 = sphi 0, %s180
      %s200 = sphi 0, %s202
      %s203 = sphi 0, %s200
      %s204 = sphi 0, %s203
      %s220 = sphi 0, %s204
    $region4: #{tpu_custom_call.1} parent=1 // loop_header_branch
      %20 = sbr.rel (%p18) target = $region8
    $region5: #{tpu_custom_call.1} parent=1 // loop_body
      %s22 = ssub.s32 %s17, 1
      %s23 = ssub.s32 %s17, 2
      %s24 = sadd.s32 %s17, 1
      %s25 = ssub.s32 %s17, %s24
      %p26 = scmp.eq.s32.totalorder %s25, 0
      %s28 = sadd.s32 %s27, 1
      %s29 = scalar_select %p26, %s27, %s28
      %p32 = pneg %p26
      %p33 = scmp.eq.s32.totalorder %s17, 1
      %p34 = por %p32, %p33
      %p35 = scmp.ne.s32.totalorder %s27, %s30
      %p36 = scmp.eq.s32.totalorder %s17, 0
      %p37 = por %p35, %p36
      %p38 = scmp.ne.s32.totalorder %s27, %s30
      %p39 = scmp.eq.s32.totalorder %s22, 1
      %p40 = por %p38, %p39
      %p41 = scmp.ne.s32.totalorder %s30, %s31
      %p42 = scmp.eq.s32.totalorder %s22, 0
      %p43 = por %p41, %p42
      %p44 = scmp.ne.s32.totalorder %s30, %s31
      %p45 = scmp.eq.s32.totalorder %s23, 1
      %p46 = por %p44, %p45
      %p48 = scmp.ne.s32.totalorder %s31, %s47
      %p49 = scmp.eq.s32.totalorder %s23, 0
      %p50 = por %p48, %p49
      %s52 = sadd.s32 %s51, 1
      %p55 = scmp.eq.s32.totalorder %s17, 1
      %p56 = scmp.ne.s32.totalorder %s51, %s53
      %p57 = scmp.eq.s32.totalorder %s17, 0
      %p58 = por %p56, %p57
      %p59 = scmp.ne.s32.totalorder %s51, %s53
      %p60 = scmp.eq.s32.totalorder %s22, 1
      %p61 = por %p59, %p60
      %p62 = scmp.ne.s32.totalorder %s53, %s54
      %p63 = scmp.eq.s32.totalorder %s22, 0
      %p64 = por %p62, %p63
      %p65 = scmp.ne.s32.totalorder %s53, %s54
      %p66 = scmp.eq.s32.totalorder %s23, 1
      %p67 = por %p65, %p66
      %p69 = scmp.ne.s32.totalorder %s54, %s68
      %p70 = scmp.eq.s32.totalorder %s23, 0
      %p71 = por %p69, %p70
      %s73 = sadd.s32 %s72, 1
      %p76 = scmp.eq.s32.totalorder %s17, 1
      %p77 = scmp.ne.s32.totalorder %s72, %s74
      %p78 = scmp.eq.s32.totalorder %s17, 0
      %p79 = por %p77, %p78
      %p80 = scmp.ne.s32.totalorder %s72, %s74
      %p81 = scmp.eq.s32.totalorder %s22, 1
      %p82 = por %p80, %p81
      %p83 = scmp.ne.s32.totalorder %s74, %s75
      %p84 = scmp.eq.s32.totalorder %s22, 0
      %p85 = por %p83, %p84
      %p86 = scmp.ne.s32.totalorder %s74, %s75
      %p87 = scmp.eq.s32.totalorder %s23, 1
      %p88 = por %p86, %p87
      %p90 = scmp.ne.s32.totalorder %s75, %s89
      %p91 = scmp.eq.s32.totalorder %s23, 0
      %p92 = por %p90, %p91
      %s94 = sadd.s32 %s93, 1
      %p97 = scmp.eq.s32.totalorder %s17, 1
      %p98 = scmp.ne.s32.totalorder %s93, %s95
      %p99 = scmp.eq.s32.totalorder %s17, 0
      %p100 = por %p98, %p99
      %p101 = scmp.ne.s32.totalorder %s93, %s95
      %p102 = scmp.eq.s32.totalorder %s22, 1
      %p103 = por %p101, %p102
      %p104 = scmp.ne.s32.totalorder %s95, %s96
      %p105 = scmp.eq.s32.totalorder %s22, 0
      %p106 = por %p104, %p105
      %p107 = scmp.ne.s32.totalorder %s95, %s96
      %p108 = scmp.eq.s32.totalorder %s23, 1
      %p109 = por %p107, %p108
      %p111 = scmp.ne.s32.totalorder %s96, %s110
      %p112 = scmp.eq.s32.totalorder %s23, 0
      %p113 = por %p111, %p112
      %s115 = sadd.s32 %s114, 1
      %p118 = scmp.eq.s32.totalorder %s17, 1
      %p119 = scmp.ne.s32.totalorder %s114, %s116
      %p120 = scmp.eq.s32.totalorder %s17, 0
      %p121 = por %p119, %p120
      %p122 = scmp.ne.s32.totalorder %s114, %s116
      %p123 = scmp.eq.s32.totalorder %s22, 1
      %p124 = por %p122, %p123
      %p125 = scmp.ne.s32.totalorder %s116, %s117
      %p126 = scmp.eq.s32.totalorder %s22, 0
      %p127 = por %p125, %p126
      %p128 = scmp.ne.s32.totalorder %s116, %s117
      %p129 = scmp.eq.s32.totalorder %s23, 1
      %p130 = por %p128, %p129
      %p132 = scmp.ne.s32.totalorder %s117, %s131
      %p133 = scmp.eq.s32.totalorder %s23, 0
      %p134 = por %p132, %p133
      %s136 = sadd.s32 %s135, 1
      %p139 = scmp.eq.s32.totalorder %s17, 1
      %p140 = scmp.ne.s32.totalorder %s135, %s137
      %p141 = scmp.eq.s32.totalorder %s17, 0
      %p142 = por %p140, %p141
      %p143 = scmp.ne.s32.totalorder %s135, %s137
      %p144 = scmp.eq.s32.totalorder %s22, 1
      %p145 = por %p143, %p144
      %p146 = scmp.ne.s32.totalorder %s137, %s138
      %p147 = scmp.eq.s32.totalorder %s22, 0
      %p148 = por %p146, %p147
      %p149 = scmp.ne.s32.totalorder %s137, %s138
      %p150 = scmp.eq.s32.totalorder %s23, 1
      %p151 = por %p149, %p150
      %p153 = scmp.ne.s32.totalorder %s138, %s152
      %p154 = scmp.eq.s32.totalorder %s23, 0
      %p155 = por %p153, %p154
      %s157 = sadd.s32 %s156, 1
      %p160 = scmp.eq.s32.totalorder %s17, 1
      %p161 = scmp.ne.s32.totalorder %s156, %s158
      %p162 = scmp.eq.s32.totalorder %s17, 0
      %p163 = por %p161, %p162
      %p164 = scmp.ne.s32.totalorder %s156, %s158
      %p165 = scmp.eq.s32.totalorder %s22, 1
      %p166 = por %p164, %p165
      %p167 = scmp.ne.s32.totalorder %s158, %s159
      %p168 = scmp.eq.s32.totalorder %s22, 0
      %p169 = por %p167, %p168
      %p170 = scmp.ne.s32.totalorder %s158, %s159
      %p171 = scmp.eq.s32.totalorder %s23, 1
      %p172 = por %p170, %p171
      %p174 = scmp.ne.s32.totalorder %s159, %s173
      %p175 = scmp.eq.s32.totalorder %s23, 0
      %p176 = por %p174, %p175
      %s178 = sadd.s32 %s177, 1
      %p181 = scmp.eq.s32.totalorder %s17, 1
      %p182 = scmp.ne.s32.totalorder %s177, %s179
      %p183 = scmp.eq.s32.totalorder %s17, 0
      %p184 = por %p182, %p183
      %p185 = scmp.ne.s32.totalorder %s177, %s179
      %p186 = scmp.eq.s32.totalorder %s22, 1
      %p187 = por %p185, %p186
      %p188 = scmp.ne.s32.totalorder %s179, %s180
      %p189 = scmp.eq.s32.totalorder %s22, 0
      %p190 = por %p188, %p189
      %p191 = scmp.ne.s32.totalorder %s179, %s180
      %p192 = scmp.eq.s32.totalorder %s23, 1
      %p193 = por %p191, %p192
      %p195 = scmp.ne.s32.totalorder %s180, %s194
      %p196 = scmp.eq.s32.totalorder %s23, 0
      %p197 = por %p195, %p196
      %s198 = ssub.s32 %s17, %s24
      %p199 = scmp.eq.s32.totalorder %s198, 0
      %s201 = sadd.s32 %s200, 1
      %s202 = scalar_select %p199, %s200, %s201
      %p205 = pneg %p199
      %p206 = scmp.eq.s32.totalorder %s17, 1
      %p207 = por %p205, %p206
      %p208 = scmp.ne.s32.totalorder %s200, %s203
      %p209 = scmp.eq.s32.totalorder %s17, 0
      %p210 = por %p208, %p209
      %p211 = scmp.ne.s32.totalorder %s200, %s203
      %p212 = scmp.eq.s32.totalorder %s22, 1
      %p213 = por %p211, %p212
      %p214 = scmp.ne.s32.totalorder %s203, %s204
      %p215 = scmp.eq.s32.totalorder %s22, 0
      %p216 = por %p214, %p215
      %p217 = scmp.ne.s32.totalorder %s203, %s204
      %p218 = scmp.eq.s32.totalorder %s23, 1
      %p219 = por %p217, %p218
      %p221 = scmp.ne.s32.totalorder %s204, %s220
      %p222 = scmp.eq.s32.totalorder %s23, 0
      %p223 = por %p221, %p222
      %p224 = scmp.le.s32.totalorder 1, %s17
      %p225 = scmp.lt.s32.totalorder %s17, 3
      %p226 = pnand %p224, %p225
      %p227 = pneg %p226
      // Predicated region
      $region9: #{tpu_custom_call.1} parent=5 // pred_check
        _
      $region10: #{tpu_custom_call.1} parent=5 // pred_check_branch
        %229 = sbr.rel (%p226) target = $region12
      $region11: #{tpu_custom_call.1} parent=5 // pred_region
        %s230 = ssub.s32 %s17, 1
        // Predicated region
        $region13: #{tpu_custom_call.1} parent=11 // pred_check
          %p231 = pneg %p64
        $region14: #{tpu_custom_call.1} parent=11 // pred_check_branch
          %233 = sbr.rel (%p231) target = $region16
        $region15: #{tpu_custom_call.1} parent=11 // pred_region
          %s235 = ssub.s32 512, 512
          %236 = vsyncadd [#allocation3], %s235
          %s237 = sshll.u32 [#allocation2], 4
          %s238 = int_to_ptr.vmem [resolvable:$true] %s237
          %243 = dma.hbm_to_vmem [thread:$0]  %s1, 512, %s238, [#allocation3], 256, 256, 16
        $region16: #{tpu_custom_call.1} parent=11 // pred_fallthru
          _
        // Predicated region
        $region17: #{tpu_custom_call.1} parent=11 // pred_check
          %p244 = pneg %p85
        $region18: #{tpu_custom_call.1} parent=11 // pred_check_branch
          %246 = sbr.rel (%p244) target = $region20
        $region19: #{tpu_custom_call.1} parent=11 // pred_region
          %s248 = ssub.s32 512, 512
          %249 = vsyncadd [#allocation5], %s248
          %s250 = sshll.u32 [#allocation4], 4
          %s251 = int_to_ptr.vmem [resolvable:$true] %s250
          %256 = dma.hbm_to_vmem [thread:$0]  %s2, 512, %s251, [#allocation5], 128, 128, 8
        $region20: #{tpu_custom_call.1} parent=11 // pred_fallthru
          _
        // Predicated region
        $region21: #{tpu_custom_call.1} parent=11 // pred_check
          %p257 = pneg %p106
        $region22: #{tpu_custom_call.1} parent=11 // pred_check_branch
          %259 = sbr.rel (%p257) target = $region24
        $region23: #{tpu_custom_call.1} parent=11 // pred_region
          _
        $region24: #{tpu_custom_call.1} parent=11 // pred_fallthru
          _
        // Predicated region
        $region25: #{tpu_custom_call.1} parent=11 // pred_check
          %p260 = pneg %p127
        $region26: #{tpu_custom_call.1} parent=11 // pred_check_branch
          %262 = sbr.rel (%p260) target = $region28
        $region27: #{tpu_custom_call.1} parent=11 // pred_region
          _
        $region28: #{tpu_custom_call.1} parent=11 // pred_fallthru
          _
        // Predicated region
        $region29: #{tpu_custom_call.1} parent=11 // pred_check
          %p263 = pneg %p148
        $region30: #{tpu_custom_call.1} parent=11 // pred_check_branch
          %265 = sbr.rel (%p263) target = $region32
        $region31: #{tpu_custom_call.1} parent=11 // pred_region
          _
        $region32: #{tpu_custom_call.1} parent=11 // pred_fallthru
          _
        // Predicated region
        $region33: #{tpu_custom_call.1} parent=11 // pred_check
          %p266 = pneg %p169
        $region34: #{tpu_custom_call.1} parent=11 // pred_check_branch
          %268 = sbr.rel (%p266) target = $region36
        $region35: #{tpu_custom_call.1} parent=11 // pred_region
          %s270 = ssub.s32 256, 256
          %271 = vsyncadd [#allocation5], %s270
          %s272 = sshll.u32 [#allocation6], 4
          %s273 = int_to_ptr.vmem [resolvable:$true] %s272
          %278 = dma.hbm_to_vmem [thread:$0]  %s6, 256, %s273, [#allocation5], 128, 128, 8
        $region36: #{tpu_custom_call.1} parent=11 // pred_fallthru
          _
        // Predicated region
        $region37: #{tpu_custom_call.1} parent=11 // pred_check
          %p279 = pneg %p190
        $region38: #{tpu_custom_call.1} parent=11 // pred_check_branch
          %281 = sbr.rel (%p279) target = $region40
        $region39: #{tpu_custom_call.1} parent=11 // pred_region
          %s283 = ssub.s32 8192, 8192
          %284 = vsyncadd [#allocation8], %s283
          %s285 = sshll.u32 [#allocation7], 4
          %s286 = int_to_ptr.vmem [resolvable:$true] %s285
          %291 = dma.hbm_to_vmem [thread:$0]  %s7, 8192, %s286, [#allocation8], 128, 128, 8
        $region40: #{tpu_custom_call.1} parent=11 // pred_fallthru
          _
      $region12: #{tpu_custom_call.1} parent=5 // pred_fallthru
        _
      %p292 = scmp.lt.s32.totalorder %s17, 2
      // Predicated region
      $region41: #{tpu_custom_call.1} parent=5 // pred_check
        %p293 = pneg %p292
      $region42: #{tpu_custom_call.1} parent=5 // pred_check_branch
        %295 = sbr.rel (%p293) target = $region44
      $region43: #{tpu_custom_call.1} parent=5 // pred_region
        // Predicated region
        $region45: #{tpu_custom_call.1} parent=43 // pred_check
          %p296 = pneg %p37
        $region46: #{tpu_custom_call.1} parent=43 // pred_check_branch
          %298 = sbr.rel (%p296) target = $region48
        $region47: #{tpu_custom_call.1} parent=43 // pred_region
          %p299 = scmp.lt.s32.totalorder %s17, 1
          %s300 = scalar_select %p299, %s17, 1
          %s301 = smul.addr %s300, 2
          %s302 = smul.addr %s301, 8
          %s303 = scalar_lea.vmem %s0, %s302
        $region48: #{tpu_custom_call.1} parent=43 // pred_fallthru
          _
      $region44: #{tpu_custom_call.1} parent=5 // pred_fallthru
        _
      %p304 = scmp.le.s32.totalorder 1, %s17
      %p305 = scmp.lt.s32.totalorder %s17, 3
      %p306 = pnand %p304, %p305
      %p307 = pneg %p306
      // Predicated region
      $region49: #{tpu_custom_call.1} parent=5 // pred_check
        _
      $region50: #{tpu_custom_call.1} parent=5 // pred_check_branch
        %309 = sbr.rel (%p306) target = $region52
      $region51: #{tpu_custom_call.1} parent=5 // pred_region
        %s310 = ssub.s32 %s17, 1
        // Predicated region
        $region53: #{tpu_custom_call.1} parent=51 // pred_check
          %p311 = pneg %p64
        $region54: #{tpu_custom_call.1} parent=51 // pred_check_branch
          %313 = sbr.rel (%p311) target = $region56
        $region55: #{tpu_custom_call.1} parent=51 // pred_region
          %314 = dma.done [#allocation3], 512
        $region56: #{tpu_custom_call.1} parent=51 // pred_fallthru
          _
        // Predicated region
        $region57: #{tpu_custom_call.1} parent=51 // pred_check
          %p315 = pneg %p85
        $region58: #{tpu_custom_call.1} parent=51 // pred_check_branch
          %317 = sbr.rel (%p315) target = $region60
        $region59: #{tpu_custom_call.1} parent=51 // pred_region
          %318 = dma.done [#allocation5], 512
        $region60: #{tpu_custom_call.1} parent=51 // pred_fallthru
          _
        // Predicated region
        $region61: #{tpu_custom_call.1} parent=51 // pred_check
          %p319 = pneg %p169
        $region62: #{tpu_custom_call.1} parent=51 // pred_check_branch
          %321 = sbr.rel (%p319) target = $region64
        $region63: #{tpu_custom_call.1} parent=51 // pred_region
          %322 = dma.done [#allocation5], 256
        $region64: #{tpu_custom_call.1} parent=51 // pred_fallthru
          _
        // Predicated region
        $region65: #{tpu_custom_call.1} parent=51 // pred_check
          %p323 = pneg %p190
        $region66: #{tpu_custom_call.1} parent=51 // pred_check_branch
          %325 = sbr.rel (%p323) target = $region68
        $region67: #{tpu_custom_call.1} parent=51 // pred_region
          %326 = dma.done [#allocation8], 8192
        $region68: #{tpu_custom_call.1} parent=51 // pred_fallthru
          _
        %p327 = scmp.lt.s32.totalorder %s22, 1
        %s328 = scalar_select %p327, %s22, 1
        %s329 = smul.addr %s328, 2
        %s330 = smul.addr %s329, 8
        %s331 = scalar_lea.vmem %s0, %s330
        %p332 = pneg %p43
        %p333 = pneg %p40
        %p334 = pneg %p64
        %p335 = pneg %p61
        %p336 = pneg %p85
        %p337 = pneg %p82
        %p338 = pneg %p106
        %p339 = pneg %p103
        %p340 = pneg %p127
        %p341 = pneg %p124
        %p342 = pneg %p148
        %p343 = pneg %p145
        %p344 = pneg %p169
        %p345 = pneg %p166
        %p346 = pneg %p190
        %p347 = pneg %p187
        %p348 = pneg %p216
        %p349 = pneg %p213
        %p350 = scmp.lt.s32.totalorder %s22, 1
        %s351 = scalar_select %p350, %s22, 1
        %s352 = smul.addr %s351, 64
        %s353 = smul.addr %s352, 8
        %s354 = scalar_lea.vmem %s8, %s353
        %p355 = scmp.lt.s32.totalorder %s22, 1
        %s356 = scalar_select %p355, %s22, 1
        %s357 = smul.addr %s356, 2
        %s358 = smul.addr %s357, 8
        %s359 = scalar_lea.vmem %s0, %s358
        %p360 = scmp.lt.s32.totalorder %s22, 1
        %s361 = scalar_select %p360, %s22, 1
        %s362 = smul.addr %s361, 64
        %s363 = smul.addr %s362, 8
        %s364 = scalar_lea.vmem %s8, %s363
        %v365 = vld [vmem:[#allocation2] sm:$0xff]
        %v366 = vld [vmem:[#allocation2 + $0x8] sm:$0xff]
        %v367 = vld [vmem:[#allocation2 + $0x10] sm:$0x1]
        %v368 = vld [vmem:[#allocation2 + $0x18] sm:$0x1]
        %v369 = vld [vmem:[#allocation4] sm:$0xff]
        %v370 = vld [vmem:[#allocation4 + $0x8] sm:$0xff]
        %v371 = vld [vmem:[#allocation4 + $0x10] sm:$0xff]
        %v372 = vld [vmem:[#allocation4 + $0x18] sm:$0xff]
        %v373 = vld [vmem:[%s359] sm:$0xff]
        %v374 = vld [vmem:[%s359 + $0x8] sm:$0xff]
        %375 = vrot.lane.b32.xlu0 %v373, 17
        %v376 = vpop.permute.xlu0 %375
        %377 = vrot.lane.b32.xlu0 %v374, 17
        %v378 = vpop.permute.xlu0 %377
        %v379 = vlaneseq
        %v380 = vand.u32 %v379, 127
        %vm381 = vcmp.lt.s32.totalorder %v380, 17
        %v382 = vsel %vm381, %v376, %v378
        %v383 = vsel %vm381, %v378, %v376
        %v384 = vlaneseq
        %v385 = vshrl.u32 %v384, 7
        %v386 = vsub.s32 0, %v385
        %v387 = vrot.slane %v365, %v386
        %v388 = vlaneseq
        %v389 = vshrl.u32 %v388, 7
        %v390 = vsub.s32 0, %v389
        %v391 = vrot.slane %v366, %v390
        %v392 = vmul.f32 %v383, %v387
        %v393 = vmul.f32 %v382, %v391
        %394 = vrot.lane.b32.xlu0 %v373, 16
        %v395 = vpop.permute.xlu0 %394
        %396 = vrot.lane.b32.xlu0 %v374, 16
        %v397 = vpop.permute.xlu0 %396
        %vm398 = vcmp.lt.s32.totalorder %v380, 16
        %v399 = vsel %vm398, %v395, %v397
        %v400 = vsel %vm398, %v397, %v395
        %v401 = vlaneseq
        %v402 = vshrl.u32 %v401, 7
        %v403 = vsub.s32 1, %v402
        %v404 = vrot.slane %v365, %v403
        %v405 = vlaneseq
        %v406 = vshrl.u32 %v405, 7
        %v407 = vsub.s32 1, %v406
        %v408 = vrot.slane %v366, %v407
        %v409 = vmul.f32 %v400, %v404
        %v410 = vmul.f32 %v399, %v408
        %411 = vrot.lane.b32.xlu0 %v373, 15
        %v412 = vpop.permute.xlu0 %411
        %413 = vrot.lane.b32.xlu0 %v374, 15
        %v414 = vpop.permute.xlu0 %413
        %vm415 = vcmp.lt.s32.totalorder %v380, 15
        %v416 = vsel %vm415, %v412, %v414
        %v417 = vsel %vm415, %v414, %v412
        %v418 = vlaneseq
        %v419 = vshrl.u32 %v418, 7
        %v420 = vsub.s32 2, %v419
        %v421 = vrot.slane %v365, %v420
        %v422 = vlaneseq
        %v423 = vshrl.u32 %v422, 7
        %v424 = vsub.s32 2, %v423
        %v425 = vrot.slane %v366, %v424
        %v426 = vmul.f32 %v417, %v421
        %v427 = vmul.f32 %v416, %v425
        %428 = vrot.lane.b32.xlu0 %v373, 1
        %v429 = vpop.permute.xlu0 %428
        %430 = vrot.lane.b32.xlu0 %v374, 1
        %v431 = vpop.permute.xlu0 %430
        %vm432 = vcmp.lt.s32.totalorder %v380, 1
        %v433 = vsel %vm432, %v429, %v431
        %v434 = vsel %vm432, %v431, %v429
        %v435 = vlaneseq
        %v436 = vshrl.u32 %v435, 7
        %v437 = vsub.s32 3, %v436
        %v438 = vrot.slane %v365, %v437
        %v439 = vlaneseq
        %v440 = vshrl.u32 %v439, 7
        %v441 = vsub.s32 3, %v440
        %v442 = vrot.slane %v366, %v441
        %v443 = vmul.f32 %v434, %v438
        %v444 = vmul.f32 %v433, %v442
        %445 = vrot.lane.b32.xlu0 %v373, 127
        %v446 = vpop.permute.xlu0 %445
        %447 = vrot.lane.b32.xlu0 %v374, 127
        %v448 = vpop.permute.xlu0 %447
        %vm449 = vcmp.lt.s32.totalorder %v380, 127
        %v450 = vsel %vm449, %v446, %v448
        %v451 = vsel %vm449, %v448, %v446
        %v452 = vlaneseq
        %v453 = vshrl.u32 %v452, 7
        %v454 = vsub.s32 5, %v453
        %v455 = vrot.slane %v365, %v454
        %v456 = vlaneseq
        %v457 = vshrl.u32 %v456, 7
        %v458 = vsub.s32 5, %v457
        %v459 = vrot.slane %v366, %v458
        %v460 = vmul.f32 %v450, %v455
        %v461 = vmul.f32 %v451, %v459
        %462 = vrot.lane.b32.xlu0 %v373, 113
        %v463 = vpop.permute.xlu0 %462
        %464 = vrot.lane.b32.xlu0 %v374, 113
        %v465 = vpop.permute.xlu0 %464
        %vm466 = vcmp.lt.s32.totalorder %v380, 113
        %v467 = vsel %vm466, %v463, %v465
        %v468 = vsel %vm466, %v465, %v463
        %v469 = vlaneseq
        %v470 = vshrl.u32 %v469, 7
        %v471 = vsub.s32 6, %v470
        %v472 = vrot.slane %v365, %v471
        %v473 = vlaneseq
        %v474 = vshrl.u32 %v473, 7
        %v475 = vsub.s32 6, %v474
        %v476 = vrot.slane %v366, %v475
        %v477 = vmul.f32 %v467, %v472
        %v478 = vmul.f32 %v468, %v476
        %479 = vrot.lane.b32.xlu0 %v373, 112
        %v480 = vpop.permute.xlu0 %479
        %481 = vrot.lane.b32.xlu0 %v374, 112
        %v482 = vpop.permute.xlu0 %481
        %vm483 = vcmp.lt.s32.totalorder %v380, 112
        %v484 = vsel %vm483, %v480, %v482
        %v485 = vsel %vm483, %v482, %v480
        %v486 = vlaneseq
        %v487 = vshrl.u32 %v486, 7
        %v488 = vsub.s32 7, %v487
        %v489 = vrot.slane %v365, %v488
        %v490 = vlaneseq
        %v491 = vshrl.u32 %v490, 7
        %v492 = vsub.s32 7, %v491
        %v493 = vrot.slane %v366, %v492
        %v494 = vmul.f32 %v484, %v489
        %v495 = vmul.f32 %v485, %v493
        %496 = vrot.lane.b32.xlu0 %v373, 111
        %v497 = vpop.permute.xlu0 %496
        %498 = vrot.lane.b32.xlu0 %v374, 111
        %v499 = vpop.permute.xlu0 %498
        %vm500 = vcmp.lt.s32.totalorder %v380, 111
        %v501 = vsel %vm500, %v497, %v499
        %v502 = vsel %vm500, %v499, %v497
        %v503 = vlaneseq
        %v504 = vshrl.u32 %v503, 7
        %v505 = vsub.s32 0, %v504
        %v506 = vrot.slane %v367, %v505
        %v507 = vlaneseq
        %v508 = vshrl.u32 %v507, 7
        %v509 = vsub.s32 0, %v508
        %v510 = vrot.slane %v368, %v509
        %v511 = vmul.f32 %v501, %v506
        %v512 = vmul.f32 %v502, %v510
        %v513 = vld [vmem:[%s3] sm:$0xff]
        %v514 = vld [vmem:[%s3 + $0x8] sm:$0xff]
        %v515 = vld [vmem:[%s3 + $0x10] sm:$0xff]
        %v516 = vld [vmem:[%s3 + $0x18] sm:$0xff]
        %518 = vset.pattern.permute.xlu0 0
        %519 = vperm.xlu0 %518, %v513
        %v520 = vpop.permute.xlu0 %519
        %523 = vset.pattern.permute.xlu0 0
        %524 = vperm.xlu0 %523, %v514
        %v525 = vpop.permute.xlu0 %524
        %528 = vset.pattern.permute.xlu0 0
        %529 = vperm.xlu0 %528, %v515
        %v530 = vpop.permute.xlu0 %529
        %533 = vset.pattern.permute.xlu0 0
        %534 = vperm.xlu0 %533, %v516
        %v535 = vpop.permute.xlu0 %534
        %vm537 = vcmask 588800
        %v539 = vsel %vm537, %v369, 0
        %v542 = vsel %vm537, %v370, 0
        %v545 = vsel %vm537, %v371, 0
        %v548 = vsel %vm537, %v372, 0
        %550 = vmatprep.subr.mxu0 %v393
        %551 = vmatpush1.msra.mxu0 %v392
        %552 = vmatprep.subr.mxu0 %v410
        %553 = vmatpush1.msra.mxu0 %v409
        %554 = vmatprep.subr.mxu0 %v427
        %555 = vmatpush1.msra.mxu0 %v426
        %556 = vmatprep.subr.mxu0 %v444
        %557 = vmatpush1.msra.mxu0 %v443
        %558 = vmatprep.subr.mxu0 %v374
        %559 = vmatpush1.msra.mxu0 %v373
        %560 = vmatprep.subr.mxu0 %v461
        %561 = vmatpush1.msra.mxu0 %v460
        %562 = vmatprep.subr.mxu0 %v478
        %563 = vmatpush1.msra.mxu0 %v477
        %564 = vmatprep.subr.mxu0 %v495
        %565 = vmatpush1.msra.mxu0 %v494
        %566 = vmatprep.subr.mxu0 %v512
        %567 = vmatpush1.msra.mxu0 %v511
        %568 = vmatprep.subr.mxu0 0.0
        %569 = vmatpush1.msra.mxu0 0.0
        %570 = vmatprep.subr.mxu0 0.0
        %571 = vmatpush1.msra.mxu0 0.0
        %572 = vmatprep.subr.mxu0 0.0
        %573 = vmatpush1.msra.mxu0 0.0
        %574 = vmatprep.subr.mxu0 0.0
        %575 = vmatpush1.msra.mxu0 0.0
        %576 = vmatprep.subr.mxu0 0.0
        %577 = vmatpush1.msra.mxu0 0.0
        %578 = vmatprep.subr.mxu0 0.0
        %579 = vmatpush1.msra.mxu0 0.0
        %580 = vmatprep.subr.mxu0 0.0
        %581 = vmatpush1.msra.mxu0 0.0
        %582 = vmatprep.subr.mxu0 0.0
        %583 = vmatpush1.msra.mxu0 0.0
        %584 = vmatprep.subr.mxu0 0.0
        %585 = vmatpush1.msra.mxu0 0.0
        %586 = vmatprep.subr.mxu0 0.0
        %587 = vmatpush1.msra.mxu0 0.0
        %588 = vmatprep.subr.mxu0 0.0
        %589 = vmatpush1.msra.mxu0 0.0
        %590 = vmatprep.subr.mxu0 0.0
        %591 = vmatpush1.msra.mxu0 0.0
        %592 = vmatprep.subr.mxu0 0.0
        %593 = vmatpush1.msra.mxu0 0.0
        %594 = vmatprep.subr.mxu0 0.0
        %595 = vmatpush1.msra.mxu0 0.0
        %596 = vmatprep.subr.mxu0 0.0
        %597 = vmatpush1.msra.mxu0 0.0
        %598 = vmatprep.subr.mxu0 0.0
        %599 = vmatpush1.msra.mxu0 0.0
        %600 = vmatprep.subr.mxu0 0.0
        %601 = vmatpush1.msra.mxu0 0.0
        %602 = vmatprep.subr.mxu0 0.0
        %603 = vmatpush1.msra.mxu0 0.0
        %604 = vmatprep.subr.mxu0 0.0
        %605 = vmatpush1.msra.mxu0 0.0
        %606 = vmatprep.subr.mxu0 0.0
        %607 = vmatpush1.msra.mxu0 0.0
        %608 = vmatprep.subr.mxu0 0.0
        %609 = vmatpush1.msra.mxu0 0.0
        %610 = vmatprep.subr.mxu0 0.0
        %611 = vmatpush1.msra.mxu0 0.0
        %612 = vmatprep.subr.mxu0 0.0
        %613 = vmatpush1.msra.mxu0 0.0
        %614 = vmatprep.mubr.f32.mxu0 0.0
        %615 = vmatmul.mubr.f32.gmra.mrb[0].mxu0 %v539
        %v616 = vpop.f32.mrb[0].mxu0
        %v617 = vadd.f32 %v520, %v616
        %v618 = vpop.f32.mrb[0].mxu0
        %v619 = vadd.f32 %v520, %v618
        %620 = vmatprep.mubr.f32.mxu0 0.0
        %621 = vmatmul.mubr.f32.gmra.mrb[0].mxu0 %v542
        %v622 = vpop.f32.mrb[0].mxu0
        %v623 = vadd.f32 %v525, %v622
        %v624 = vpop.f32.mrb[0].mxu0
        %v625 = vadd.f32 %v525, %v624
        %626 = vmatprep.mubr.f32.mxu0 0.0
        %627 = vmatmul.mubr.f32.gmra.mrb[0].mxu0 %v545
        %v628 = vpop.f32.mrb[0].mxu0
        %v629 = vadd.f32 %v530, %v628
        %v630 = vpop.f32.mrb[0].mxu0
        %v631 = vadd.f32 %v530, %v630
        %632 = vmatprep.mubr.f32.mxu0 0.0
        %633 = vmatmul.mubr.f32.gmra.mrb[0].mxu0 %v548
        %v634 = vpop.f32.mrb[0].mxu0
        %v635 = vadd.f32 %v535, %v634
        %v636 = vpop.f32.mrb[0].mxu0
        %v637 = vadd.f32 %v535, %v636
        %638 = vdwg.mxu0
        %v639 = vmax.f32 %v617, 0.0
        %v640 = vmax.f32 %v619, 0.0
        %v641 = vmax.f32 %v623, 0.0
        %v642 = vmax.f32 %v625, 0.0
        %v643 = vmax.f32 %v629, 0.0
        %v644 = vmax.f32 %v631, 0.0
        %v645 = vmax.f32 %v635, 0.0
        %v646 = vmax.f32 %v637, 0.0
        %v647 = vld [vmem:[%s4] sm:$0xff]
        %v648 = vld [vmem:[%s4 + $0x8] sm:$0xff]
        %v649 = vld [vmem:[%s4 + $0x10] sm:$0xff]
        %650 = vrot.lane.b32.xlu0 %v639, 17
        %v651 = vpop.permute.xlu0 %650
        %652 = vrot.lane.b32.xlu0 %v641, 17
        %v653 = vpop.permute.xlu0 %652
        %654 = vrot.lane.b32.xlu0 %v643, 17
        %v655 = vpop.permute.xlu0 %654
        %656 = vrot.lane.b32.xlu0 %v645, 17
        %v657 = vpop.permute.xlu0 %656
        %658 = vrot.lane.b32.xlu0 %v640, 17
        %v659 = vpop.permute.xlu0 %658
        %660 = vrot.lane.b32.xlu0 %v642, 17
        %v661 = vpop.permute.xlu0 %660
        %662 = vrot.lane.b32.xlu0 %v644, 17
        %v663 = vpop.permute.xlu0 %662
        %664 = vrot.lane.b32.xlu0 %v646, 17
        %v665 = vpop.permute.xlu0 %664
        %v666 = vsel %vm381, %v651, %v659
        %v667 = vsel %vm381, %v653, %v661
        %v668 = vsel %vm381, %v655, %v663
        %v669 = vsel %vm381, %v657, %v665
        %v670 = vsel %vm381, %v659, %v651
        %v671 = vsel %vm381, %v661, %v653
        %v672 = vsel %vm381, %v663, %v655
        %v673 = vsel %vm381, %v665, %v657
        %v674 = vmul.f32 %v670, %v387
        %v675 = vmul.f32 %v666, %v391
        %v676 = vmul.f32 %v671, %v387
        %v677 = vmul.f32 %v667, %v391
        %v678 = vmul.f32 %v672, %v387
        %v679 = vmul.f32 %v668, %v391
        %v680 = vmul.f32 %v673, %v387
        %v681 = vmul.f32 %v669, %v391
        %682 = vrot.lane.b32.xlu0 %v639, 16
        %v683 = vpop.permute.xlu0 %682
        %684 = vrot.lane.b32.xlu0 %v641, 16
        %v685 = vpop.permute.xlu0 %684
        %686 = vrot.lane.b32.xlu0 %v643, 16
        %v687 = vpop.permute.xlu0 %686
        %688 = vrot.lane.b32.xlu0 %v645, 16
        %v689 = vpop.permute.xlu0 %688
        %690 = vrot.lane.b32.xlu0 %v640, 16
        %v691 = vpop.permute.xlu0 %690
        %692 = vrot.lane.b32.xlu0 %v642, 16
        %v693 = vpop.permute.xlu0 %692
        %694 = vrot.lane.b32.xlu0 %v644, 16
        %v695 = vpop.permute.xlu0 %694
        %696 = vrot.lane.b32.xlu0 %v646, 16
        %v697 = vpop.permute.xlu0 %696
        %v698 = vsel %vm398, %v683, %v691
        %v699 = vsel %vm398, %v685, %v693
        %v700 = vsel %vm398, %v687, %v695
        %v701 = vsel %vm398, %v689, %v697
        %v702 = vsel %vm398, %v691, %v683
        %v703 = vsel %vm398, %v693, %v685
        %v704 = vsel %vm398, %v695, %v687
        %v705 = vsel %vm398, %v697, %v689
        %v706 = vmul.f32 %v702, %v404
        %v707 = vmul.f32 %v698, %v408
        %v708 = vmul.f32 %v703, %v404
        %v709 = vmul.f32 %v699, %v408
        %v710 = vmul.f32 %v704, %v404
        %v711 = vmul.f32 %v700, %v408
        %v712 = vmul.f32 %v705, %v404
        %v713 = vmul.f32 %v701, %v408
        %714 = vrot.lane.b32.xlu0 %v639, 15
        %v715 = vpop.permute.xlu0 %714
        %716 = vrot.lane.b32.xlu0 %v641, 15
        %v717 = vpop.permute.xlu0 %716
        %718 = vrot.lane.b32.xlu0 %v643, 15
        %v719 = vpop.permute.xlu0 %718
        %720 = vrot.lane.b32.xlu0 %v645, 15
        %v721 = vpop.permute.xlu0 %720
        %722 = vrot.lane.b32.xlu0 %v640, 15
        %v723 = vpop.permute.xlu0 %722
        %724 = vrot.lane.b32.xlu0 %v642, 15
        %v725 = vpop.permute.xlu0 %724
        %726 = vrot.lane.b32.xlu0 %v644, 15
        %v727 = vpop.permute.xlu0 %726
        %728 = vrot.lane.b32.xlu0 %v646, 15
        %v729 = vpop.permute.xlu0 %728
        %v730 = vsel %vm415, %v715, %v723
        %v731 = vsel %vm415, %v717, %v725
        %v732 = vsel %vm415, %v719, %v727
        %v733 = vsel %vm415, %v721, %v729
        %v734 = vsel %vm415, %v723, %v715
        %v735 = vsel %vm415, %v725, %v717
        %v736 = vsel %vm415, %v727, %v719
        %v737 = vsel %vm415, %v729, %v721
        %v738 = vmul.f32 %v734, %v421
        %v739 = vmul.f32 %v730, %v425
        %v740 = vmul.f32 %v735, %v421
        %v741 = vmul.f32 %v731, %v425
        %v742 = vmul.f32 %v736, %v421
        %v743 = vmul.f32 %v732, %v425
        %v744 = vmul.f32 %v737, %v421
        %v745 = vmul.f32 %v733, %v425
        %746 = vrot.lane.b32.xlu0 %v639, 1
        %v747 = vpop.permute.xlu0 %746
        %748 = vrot.lane.b32.xlu0 %v641, 1
        %v749 = vpop.permute.xlu0 %748
        %750 = vrot.lane.b32.xlu0 %v643, 1
        %v751 = vpop.permute.xlu0 %750
        %752 = vrot.lane.b32.xlu0 %v645, 1
        %v753 = vpop.permute.xlu0 %752
        %754 = vrot.lane.b32.xlu0 %v640, 1
        %v755 = vpop.permute.xlu0 %754
        %756 = vrot.lane.b32.xlu0 %v642, 1
        %v757 = vpop.permute.xlu0 %756
        %758 = vrot.lane.b32.xlu0 %v644, 1
        %v759 = vpop.permute.xlu0 %758
        %760 = vrot.lane.b32.xlu0 %v646, 1
        %v761 = vpop.permute.xlu0 %760
        %v762 = vsel %vm432, %v747, %v755
        %v763 = vsel %vm432, %v749, %v757
        %v764 = vsel %vm432, %v751, %v759
        %v765 = vsel %vm432, %v753, %v761
        %v766 = vsel %vm432, %v755, %v747
        %v767 = vsel %vm432, %v757, %v749
        %v768 = vsel %vm432, %v759, %v751
        %v769 = vsel %vm432, %v761, %v753
        %v770 = vmul.f32 %v766, %v438
        %v771 = vmul.f32 %v762, %v442
        %v772 = vmul.f32 %v767, %v438
        %v773 = vmul.f32 %v763, %v442
        %v774 = vmul.f32 %v768, %v438
        %v775 = vmul.f32 %v764, %v442
        %v776 = vmul.f32 %v769, %v438
        %v777 = vmul.f32 %v765, %v442
        %778 = vrot.lane.b32.xlu0 %v639, 127
        %v779 = vpop.permute.xlu0 %778
        %780 = vrot.lane.b32.xlu0 %v641, 127
        %v781 = vpop.permute.xlu0 %780
        %782 = vrot.lane.b32.xlu0 %v643, 127
        %v783 = vpop.permute.xlu0 %782
        %784 = vrot.lane.b32.xlu0 %v645, 127
        %v785 = vpop.permute.xlu0 %784
        %786 = vrot.lane.b32.xlu0 %v640, 127
        %v787 = vpop.permute.xlu0 %786
        %788 = vrot.lane.b32.xlu0 %v642, 127
        %v789 = vpop.permute.xlu0 %788
        %790 = vrot.lane.b32.xlu0 %v644, 127
        %v791 = vpop.permute.xlu0 %790
        %792 = vrot.lane.b32.xlu0 %v646, 127
        %v793 = vpop.permute.xlu0 %792
        %v794 = vsel %vm449, %v779, %v787
        %v795 = vsel %vm449, %v781, %v789
        %v796 = vsel %vm449, %v783, %v791
        %v797 = vsel %vm449, %v785, %v793
        %v798 = vsel %vm449, %v787, %v779
        %v799 = vsel %vm449, %v789, %v781
        %v800 = vsel %vm449, %v791, %v783
        %v801 = vsel %vm449, %v793, %v785
        %v802 = vmul.f32 %v794, %v455
        %v803 = vmul.f32 %v798, %v459
        %v804 = vmul.f32 %v795, %v455
        %v805 = vmul.f32 %v799, %v459
        %v806 = vmul.f32 %v796, %v455
        %v807 = vmul.f32 %v800, %v459
        %v808 = vmul.f32 %v797, %v455
        %v809 = vmul.f32 %v801, %v459
        %810 = vrot.lane.b32.xlu0 %v639, 113
        %v811 = vpop.permute.xlu0 %810
        %812 = vrot.lane.b32.xlu0 %v641, 113
        %v813 = vpop.permute.xlu0 %812
        %814 = vrot.lane.b32.xlu0 %v643, 113
        %v815 = vpop.permute.xlu0 %814
        %816 = vrot.lane.b32.xlu0 %v645, 113
        %v817 = vpop.permute.xlu0 %816
        %818 = vrot.lane.b32.xlu0 %v640, 113
        %v819 = vpop.permute.xlu0 %818
        %820 = vrot.lane.b32.xlu0 %v642, 113
        %v821 = vpop.permute.xlu0 %820
        %822 = vrot.lane.b32.xlu0 %v644, 113
        %v823 = vpop.permute.xlu0 %822
        %824 = vrot.lane.b32.xlu0 %v646, 113
        %v825 = vpop.permute.xlu0 %824
        %v826 = vsel %vm466, %v811, %v819
        %v827 = vsel %vm466, %v813, %v821
        %v828 = vsel %vm466, %v815, %v823
        %v829 = vsel %vm466, %v817, %v825
        %v830 = vsel %vm466, %v819, %v811
        %v831 = vsel %vm466, %v821, %v813
        %v832 = vsel %vm466, %v823, %v815
        %v833 = vsel %vm466, %v825, %v817
        %v834 = vmul.f32 %v826, %v472
        %v835 = vmul.f32 %v830, %v476
        %v836 = vmul.f32 %v827, %v472
        %v837 = vmul.f32 %v831, %v476
        %v838 = vmul.f32 %v828, %v472
        %v839 = vmul.f32 %v832, %v476
        %v840 = vmul.f32 %v829, %v472
        %v841 = vmul.f32 %v833, %v476
        %842 = vrot.lane.b32.xlu0 %v639, 112
        %v843 = vpop.permute.xlu0 %842
        %844 = vrot.lane.b32.xlu0 %v641, 112
        %v845 = vpop.permute.xlu0 %844
        %846 = vrot.lane.b32.xlu0 %v643, 112
        %v847 = vpop.permute.xlu0 %846
        %848 = vrot.lane.b32.xlu0 %v645, 112
        %v849 = vpop.permute.xlu0 %848
        %850 = vrot.lane.b32.xlu0 %v640, 112
        %v851 = vpop.permute.xlu0 %850
        %852 = vrot.lane.b32.xlu0 %v642, 112
        %v853 = vpop.permute.xlu0 %852
        %854 = vrot.lane.b32.xlu0 %v644, 112
        %v855 = vpop.permute.xlu0 %854
        %856 = vrot.lane.b32.xlu0 %v646, 112
        %v857 = vpop.permute.xlu0 %856
        %v858 = vsel %vm483, %v843, %v851
        %v859 = vsel %vm483, %v845, %v853
        %v860 = vsel %vm483, %v847, %v855
        %v861 = vsel %vm483, %v849, %v857
        %v862 = vsel %vm483, %v851, %v843
        %v863 = vsel %vm483, %v853, %v845
        %v864 = vsel %vm483, %v855, %v847
        %v865 = vsel %vm483, %v857, %v849
        %v866 = vmul.f32 %v858, %v489
        %v867 = vmul.f32 %v862, %v493
        %v868 = vmul.f32 %v859, %v489
        %v869 = vmul.f32 %v863, %v493
        %v870 = vmul.f32 %v860, %v489
        %v871 = vmul.f32 %v864, %v493
        %v872 = vmul.f32 %v861, %v489
        %v873 = vmul.f32 %v865, %v493
        %874 = vrot.lane.b32.xlu0 %v639, 111
        %v875 = vpop.permute.xlu0 %874
        %876 = vrot.lane.b32.xlu0 %v641, 111
        %v877 = vpop.permute.xlu0 %876
        %878 = vrot.lane.b32.xlu0 %v643, 111
        %v879 = vpop.permute.xlu0 %878
        %880 = vrot.lane.b32.xlu0 %v645, 111
        %v881 = vpop.permute.xlu0 %880
        %882 = vrot.lane.b32.xlu0 %v640, 111
        %v883 = vpop.permute.xlu0 %882
        %884 = vrot.lane.b32.xlu0 %v642, 111
        %v885 = vpop.permute.xlu0 %884
        %886 = vrot.lane.b32.xlu0 %v644, 111
        %v887 = vpop.permute.xlu0 %886
        %888 = vrot.lane.b32.xlu0 %v646, 111
        %v889 = vpop.permute.xlu0 %888
        %v890 = vsel %vm500, %v875, %v883
        %v891 = vsel %vm500, %v877, %v885
        %v892 = vsel %vm500, %v879, %v887
        %v893 = vsel %vm500, %v881, %v889
        %v894 = vsel %vm500, %v883, %v875
        %v895 = vsel %vm500, %v885, %v877
        %v896 = vsel %vm500, %v887, %v879
        %v897 = vsel %vm500, %v889, %v881
        %v898 = vmul.f32 %v890, %v506
        %v899 = vmul.f32 %v894, %v510
        %v900 = vmul.f32 %v891, %v506
        %v901 = vmul.f32 %v895, %v510
        %v902 = vmul.f32 %v892, %v506
        %v903 = vmul.f32 %v896, %v510
        %v904 = vmul.f32 %v893, %v506
        %v905 = vmul.f32 %v897, %v510
        %v906 = vld [vmem:[%s5] sm:$0xff]
        %908 = vset.pattern.permute.xlu0 0
        %909 = vperm.xlu0 %908, %v906
        %v910 = vpop.permute.xlu0 %909
        %vm912 = vcmask 261120
        %v914 = vsel %vm912, %v649, 0
        %916 = vmatprep.subr.mxu0 %v675
        %917 = vmatpush1.msra.mxu0 %v674
        %918 = vmatprep.subr.mxu0 %v677
        %919 = vmatpush1.msra.mxu0 %v676
        %920 = vmatprep.subr.mxu0 %v679
        %921 = vmatpush1.msra.mxu0 %v678
        %922 = vmatprep.subr.mxu0 %v681
        %923 = vmatpush1.msra.mxu0 %v680
        %924 = vmatprep.subr.mxu0 %v707
        %925 = vmatpush1.msra.mxu0 %v706
        %926 = vmatprep.subr.mxu0 %v709
        %927 = vmatpush1.msra.mxu0 %v708
        %928 = vmatprep.subr.mxu0 %v711
        %929 = vmatpush1.msra.mxu0 %v710
        %930 = vmatprep.subr.mxu0 %v713
        %931 = vmatpush1.msra.mxu0 %v712
        %932 = vmatprep.subr.mxu0 %v739
        %933 = vmatpush1.msra.mxu0 %v738
        %934 = vmatprep.subr.mxu0 %v741
        %935 = vmatpush1.msra.mxu0 %v740
        %936 = vmatprep.subr.mxu0 %v743
        %937 = vmatpush1.msra.mxu0 %v742
        %938 = vmatprep.subr.mxu0 %v745
        %939 = vmatpush1.msra.mxu0 %v744
        %940 = vmatprep.subr.mxu0 %v771
        %941 = vmatpush1.msra.mxu0 %v770
        %942 = vmatprep.subr.mxu0 %v773
        %943 = vmatpush1.msra.mxu0 %v772
        %944 = vmatprep.subr.mxu0 %v775
        %945 = vmatpush1.msra.mxu0 %v774
        %946 = vmatprep.subr.mxu0 %v777
        %947 = vmatpush1.msra.mxu0 %v776
        %948 = vmatprep.subr.mxu0 %v640
        %949 = vmatpush1.msra.mxu0 %v639
        %950 = vmatprep.subr.mxu0 %v642
        %951 = vmatpush1.msra.mxu0 %v641
        %952 = vmatprep.subr.mxu0 %v644
        %953 = vmatpush1.msra.mxu0 %v643
        %954 = vmatprep.subr.mxu0 %v646
        %955 = vmatpush1.msra.mxu0 %v645
        %956 = vmatprep.subr.mxu0 %v803
        %957 = vmatpush1.msra.mxu0 %v802
        %958 = vmatprep.subr.mxu0 %v805
        %959 = vmatpush1.msra.mxu0 %v804
        %960 = vmatprep.subr.mxu0 %v807
        %961 = vmatpush1.msra.mxu0 %v806
        %962 = vmatprep.subr.mxu0 %v809
        %963 = vmatpush1.msra.mxu0 %v808
        %964 = vmatprep.subr.mxu0 %v835
        %965 = vmatpush1.msra.mxu0 %v834
        %966 = vmatprep.subr.mxu0 %v837
        %967 = vmatpush1.msra.mxu0 %v836
        %968 = vmatprep.subr.mxu0 %v839
        %969 = vmatpush1.msra.mxu0 %v838
        %970 = vmatprep.subr.mxu0 %v841
        %971 = vmatpush1.msra.mxu0 %v840
        %972 = vmatprep.subr.mxu0 %v867
        %973 = vmatpush1.msra.mxu0 %v866
        %974 = vmatprep.subr.mxu0 %v869
        %975 = vmatpush1.msra.mxu0 %v868
        %976 = vmatprep.subr.mxu0 %v871
        %977 = vmatpush1.msra.mxu0 %v870
        %978 = vmatprep.subr.mxu0 %v873
        %979 = vmatpush1.msra.mxu0 %v872
        %980 = vmatprep.mubr.f32.mxu0 %v648
        %981 = vmatmul.mubr.f32.gmra.mrb[0].mxu0 %v647
        %v982 = vpop.f32.mrb[0].mxu0
        %v983 = vadd.f32 %v910, %v982
        %v984 = vpop.f32.mrb[0].mxu0
        %v985 = vadd.f32 %v910, %v984
        %986 = vdwg.mxu0
        %987 = vmatprep.subr.mxu0 %v899
        %988 = vmatpush1.msra.mxu0 %v898
        %989 = vmatprep.subr.mxu0 %v901
        %990 = vmatpush1.msra.mxu0 %v900
        %991 = vmatprep.subr.mxu0 %v903
        %992 = vmatpush1.msra.mxu0 %v902
        %993 = vmatprep.subr.mxu0 %v905
        %994 = vmatpush1.msra.mxu0 %v904
        %995 = vmatprep.subr.mxu0 0.0
        %996 = vmatpush1.msra.mxu0 0.0
        %997 = vmatprep.subr.mxu0 0.0
        %998 = vmatpush1.msra.mxu0 0.0
        %999 = vmatprep.subr.mxu0 0.0
        %1000 = vmatpush1.msra.mxu0 0.0
        %1001 = vmatprep.subr.mxu0 0.0
        %1002 = vmatpush1.msra.mxu0 0.0
        %1003 = vmatprep.subr.mxu0 0.0
        %1004 = vmatpush1.msra.mxu0 0.0
        %1005 = vmatprep.subr.mxu0 0.0
        %1006 = vmatpush1.msra.mxu0 0.0
        %1007 = vmatprep.subr.mxu0 0.0
        %1008 = vmatpush1.msra.mxu0 0.0
        %1009 = vmatprep.subr.mxu0 0.0
        %1010 = vmatpush1.msra.mxu0 0.0
        %1011 = vmatprep.subr.mxu0 0.0
        %1012 = vmatpush1.msra.mxu0 0.0
        %1013 = vmatprep.subr.mxu0 0.0
        %1014 = vmatpush1.msra.mxu0 0.0
        %1015 = vmatprep.subr.mxu0 0.0
        %1016 = vmatpush1.msra.mxu0 0.0
        %1017 = vmatprep.subr.mxu0 0.0
        %1018 = vmatpush1.msra.mxu0 0.0
        %1019 = vmatprep.subr.mxu0 0.0
        %1020 = vmatpush1.msra.mxu0 0.0
        %1021 = vmatprep.subr.mxu0 0.0
        %1022 = vmatpush1.msra.mxu0 0.0
        %1023 = vmatprep.subr.mxu0 0.0
        %1024 = vmatpush1.msra.mxu0 0.0
        %1025 = vmatprep.subr.mxu0 0.0
        %1026 = vmatpush1.msra.mxu0 0.0
        %1027 = vmatprep.subr.mxu0 0.0
        %1028 = vmatpush1.msra.mxu0 0.0
        %1029 = vmatprep.subr.mxu0 0.0
        %1030 = vmatpush1.msra.mxu0 0.0
        %1031 = vmatprep.subr.mxu0 0.0
        %1032 = vmatpush1.msra.mxu0 0.0
        %1033 = vmatprep.subr.mxu0 0.0
        %1034 = vmatpush1.msra.mxu0 0.0
        %1035 = vmatprep.subr.mxu0 0.0
        %1036 = vmatpush1.msra.mxu0 0.0
        %1037 = vmatprep.subr.mxu0 0.0
        %1038 = vmatpush1.msra.mxu0 0.0
        %1039 = vmatprep.subr.mxu0 0.0
        %1040 = vmatpush1.msra.mxu0 0.0
        %1041 = vmatprep.subr.mxu0 0.0
        %1042 = vmatpush1.msra.mxu0 0.0
        %1043 = vmatprep.subr.mxu0 0.0
        %1044 = vmatpush1.msra.mxu0 0.0
        %1045 = vmatprep.subr.mxu0 0.0
        %1046 = vmatpush1.msra.mxu0 0.0
        %1047 = vmatprep.subr.mxu0 0.0
        %1048 = vmatpush1.msra.mxu0 0.0
        %1049 = vmatprep.subr.mxu0 0.0
        %1050 = vmatpush1.msra.mxu0 0.0
        %1051 = vmatprep.mubr.f32.mxu0 0.0
        %1052 = vmatmul.mubr.f32.gmra.mrb[0].mxu0 %v914
        %v1053 = vpop.f32.mrb[0].mxu0
        %v1054 = vadd.f32 %v983, %v1053
        %v1055 = vpop.f32.mrb[0].mxu0
        %v1056 = vadd.f32 %v985, %v1055
        %1057 = vdwg.mxu0
        %1059 = vrot.lane.b32.xlu0 %v1054, 112
        %v1060 = vpop.permute.xlu0 %1059
        %1061 = vrot.lane.b32.xlu0 %v1054, 96
        %v1062 = vpop.permute.xlu0 %1061
        %1063 = vrot.lane.b32.xlu0 %v1054, 80
        %v1064 = vpop.permute.xlu0 %1063
        %1065 = vrot.lane.b32.xlu0 %v1054, 64
        %v1066 = vpop.permute.xlu0 %1065
        %1067 = vrot.lane.b32.xlu0 %v1054, 48
        %v1068 = vpop.permute.xlu0 %1067
        %1069 = vrot.lane.b32.xlu0 %v1054, 32
        %v1070 = vpop.permute.xlu0 %1069
        %1071 = vrot.lane.b32.xlu0 %v1054, 16
        %v1072 = vpop.permute.xlu0 %1071
        %1074 = vrot.lane.b32.xlu0 %v1056, 112
        %v1075 = vpop.permute.xlu0 %1074
        %1076 = vrot.lane.b32.xlu0 %v1056, 96
        %v1077 = vpop.permute.xlu0 %1076
        %1078 = vrot.lane.b32.xlu0 %v1056, 80
        %v1079 = vpop.permute.xlu0 %1078
        %1080 = vrot.lane.b32.xlu0 %v1056, 64
        %v1081 = vpop.permute.xlu0 %1080
        %1082 = vrot.lane.b32.xlu0 %v1056, 48
        %v1083 = vpop.permute.xlu0 %1082
        %1084 = vrot.lane.b32.xlu0 %v1056, 32
        %v1085 = vpop.permute.xlu0 %1084
        %1086 = vrot.lane.b32.xlu0 %v1056, 16
        %v1087 = vpop.permute.xlu0 %1086
        %v1088 = vld [vmem:[#allocation6] sm:$0xff]
        %v1089 = vld [vmem:[#allocation6 + $0x8] sm:$0xff]
        %vm1090 = vcmask 130048
        %v1091 = vsel %vm1090, %v1054, 0
        %v1093 = vsel %vm1090, %v1060, 0
        %v1095 = vsel %vm1090, %v1062, 0
        %v1097 = vsel %vm1090, %v1064, 0
        %v1099 = vsel %vm1090, %v1066, 0
        %v1101 = vsel %vm1090, %v1068, 0
        %v1103 = vsel %vm1090, %v1070, 0
        %v1105 = vsel %vm1090, %v1072, 0
        %v1107 = vsel %vm1090, %v1056, 0
        %v1109 = vsel %vm1090, %v1075, 0
        %v1111 = vsel %vm1090, %v1077, 0
        %v1113 = vsel %vm1090, %v1079, 0
        %v1115 = vsel %vm1090, %v1081, 0
        %v1117 = vsel %vm1090, %v1083, 0
        %v1119 = vsel %vm1090, %v1085, 0
        %v1121 = vsel %vm1090, %v1087, 0
        %1123 = vmatprep.subr.mxu0 0.0
        %1124 = vmatpush1.msra.mxu0 %v1088
        %1125 = vmatprep.subr.mxu0 0.0
        %1126 = vmatpush1.msra.mxu0 %v1089
        %1127 = vmatprep.subr.mxu0 0.0
        %1128 = vmatpush1.msra.mxu0 0.0
        %1129 = vmatprep.subr.mxu0 0.0
        %1130 = vmatpush1.msra.mxu0 0.0
        %1131 = vmatprep.subr.mxu0 0.0
        %1132 = vmatpush1.msra.mxu0 0.0
        %1133 = vmatprep.subr.mxu0 0.0
        %1134 = vmatpush1.msra.mxu0 0.0
        %1135 = vmatprep.subr.mxu0 0.0
        %1136 = vmatpush1.msra.mxu0 0.0
        %1137 = vmatprep.subr.mxu0 0.0
        %1138 = vmatpush1.msra.mxu0 0.0
        %1139 = vmatprep.subr.mxu0 0.0
        %1140 = vmatpush1.msra.mxu0 0.0
        %1141 = vmatprep.subr.mxu0 0.0
        %1142 = vmatpush1.msra.mxu0 0.0
        %1143 = vmatprep.subr.mxu0 0.0
        %1144 = vmatpush1.msra.mxu0 0.0
        %1145 = vmatprep.subr.mxu0 0.0
        %1146 = vmatpush1.msra.mxu0 0.0
        %1147 = vmatprep.subr.mxu0 0.0
        %1148 = vmatpush1.msra.mxu0 0.0
        %1149 = vmatprep.subr.mxu0 0.0
        %1150 = vmatpush1.msra.mxu0 0.0
        %1151 = vmatprep.subr.mxu0 0.0
        %1152 = vmatpush1.msra.mxu0 0.0
        %1153 = vmatprep.subr.mxu0 0.0
        %1154 = vmatpush1.msra.mxu0 0.0
        %1155 = vmatprep.subr.mxu0 0.0
        %1156 = vmatpush1.msra.mxu0 0.0
        %1157 = vmatprep.subr.mxu0 0.0
        %1158 = vmatpush1.msra.mxu0 0.0
        %1159 = vmatprep.subr.mxu0 0.0
        %1160 = vmatpush1.msra.mxu0 0.0
        %1161 = vmatprep.subr.mxu0 0.0
        %1162 = vmatpush1.msra.mxu0 0.0
        %1163 = vmatprep.subr.mxu0 0.0
        %1164 = vmatpush1.msra.mxu0 0.0
        %1165 = vmatprep.subr.mxu0 0.0
        %1166 = vmatpush1.msra.mxu0 0.0
        %1167 = vmatprep.subr.mxu0 0.0
        %1168 = vmatpush1.msra.mxu0 0.0
        %1169 = vmatprep.subr.mxu0 0.0
        %1170 = vmatpush1.msra.mxu0 0.0
        %1171 = vmatprep.subr.mxu0 0.0
        %1172 = vmatpush1.msra.mxu0 0.0
        %1173 = vmatprep.subr.mxu0 0.0
        %1174 = vmatpush1.msra.mxu0 0.0
        %1175 = vmatprep.subr.mxu0 0.0
        %1176 = vmatpush1.msra.mxu0 0.0
        %1177 = vmatprep.subr.mxu0 0.0
        %1178 = vmatpush1.msra.mxu0 0.0
        %1179 = vmatprep.subr.mxu0 0.0
        %1180 = vmatpush1.msra.mxu0 0.0
        %1181 = vmatprep.subr.mxu0 0.0
        %1182 = vmatpush1.msra.mxu0 0.0
        %1183 = vmatprep.subr.mxu0 0.0
        %1184 = vmatpush1.msra.mxu0 0.0
        %1185 = vmatprep.subr.mxu0 0.0
        %1186 = vmatpush1.msra.mxu0 0.0
        %1187 = vmatprep.mubr.f32.mxu0 0.0
        %1188 = vmatmul.mubr.f32.gmra.mrb[0].mxu0 %v1091
        %v1189 = vpop.f32.mrb[0].mxu0
        %v1190 = vadd.f32 0.0, %v1189
        %v1191 = vpop.f32.mrb[0].mxu0
        %1192 = vmatprep.mubr.f32.mxu0 0.0
        %1193 = vmatmul.mubr.f32.gmra.mrb[0].mxu0 %v1093
        %v1194 = vpop.f32.mrb[0].mxu0
        %v1195 = vadd.f32 0.0, %v1194
        %v1196 = vpop.f32.mrb[0].mxu0
        %1197 = vmatprep.mubr.f32.mxu0 0.0
        %1198 = vmatmul.mubr.f32.gmra.mrb[0].mxu0 %v1095
        %v1199 = vpop.f32.mrb[0].mxu0
        %v1200 = vadd.f32 0.0, %v1199
        %v1201 = vpop.f32.mrb[0].mxu0
        %1202 = vmatprep.mubr.f32.mxu0 0.0
        %1203 = vmatmul.mubr.f32.gmra.mrb[0].mxu0 %v1097
        %v1204 = vpop.f32.mrb[0].mxu0
        %v1205 = vadd.f32 0.0, %v1204
        %v1206 = vpop.f32.mrb[0].mxu0
        %1207 = vmatprep.mubr.f32.mxu0 0.0
        %1208 = vmatmul.mubr.f32.gmra.mrb[0].mxu0 %v1099
        %v1209 = vpop.f32.mrb[0].mxu0
        %v1210 = vadd.f32 0.0, %v1209
        %v1211 = vpop.f32.mrb[0].mxu0
        %1212 = vmatprep.mubr.f32.mxu0 0.0
        %1213 = vmatmul.mubr.f32.gmra.mrb[0].mxu0 %v1101
        %v1214 = vpop.f32.mrb[0].mxu0
        %v1215 = vadd.f32 0.0, %v1214
        %v1216 = vpop.f32.mrb[0].mxu0
        %1217 = vmatprep.mubr.f32.mxu0 0.0
        %1218 = vmatmul.mubr.f32.gmra.mrb[0].mxu0 %v1103
        %v1219 = vpop.f32.mrb[0].mxu0
        %v1220 = vadd.f32 0.0, %v1219
        %v1221 = vpop.f32.mrb[0].mxu0
        %1222 = vmatprep.mubr.f32.mxu0 0.0
        %1223 = vmatmul.mubr.f32.gmra.mrb[0].mxu0 %v1105
        %v1224 = vpop.f32.mrb[0].mxu0
        %v1225 = vadd.f32 0.0, %v1224
        %v1226 = vpop.f32.mrb[0].mxu0
        %1227 = vmatprep.mubr.f32.mxu0 0.0
        %1228 = vmatmul.mubr.f32.gmra.mrb[0].mxu0 %v1107
        %v1229 = vpop.f32.mrb[0].mxu0
        %v1230 = vadd.f32 0.0, %v1229
        %v1231 = vpop.f32.mrb[0].mxu0
        %1232 = vmatprep.mubr.f32.mxu0 0.0
        %1233 = vmatmul.mubr.f32.gmra.mrb[0].mxu0 %v1109
        %v1234 = vpop.f32.mrb[0].mxu0
        %v1235 = vadd.f32 0.0, %v1234
        %v1236 = vpop.f32.mrb[0].mxu0
        %1237 = vmatprep.mubr.f32.mxu0 0.0
        %1238 = vmatmul.mubr.f32.gmra.mrb[0].mxu0 %v1111
        %v1239 = vpop.f32.mrb[0].mxu0
        %v1240 = vadd.f32 0.0, %v1239
        %v1241 = vpop.f32.mrb[0].mxu0
        %1242 = vmatprep.mubr.f32.mxu0 0.0
        %1243 = vmatmul.mubr.f32.gmra.mrb[0].mxu0 %v1113
        %v1244 = vpop.f32.mrb[0].mxu0
        %v1245 = vadd.f32 0.0, %v1244
        %v1246 = vpop.f32.mrb[0].mxu0
        %1247 = vmatprep.mubr.f32.mxu0 0.0
        %1248 = vmatmul.mubr.f32.gmra.mrb[0].mxu0 %v1115
        %v1249 = vpop.f32.mrb[0].mxu0
        %v1250 = vadd.f32 0.0, %v1249
        %v1251 = vpop.f32.mrb[0].mxu0
        %1252 = vmatprep.mubr.f32.mxu0 0.0
        %1253 = vmatmul.mubr.f32.gmra.mrb[0].mxu0 %v1117
        %v1254 = vpop.f32.mrb[0].mxu0
        %v1255 = vadd.f32 0.0, %v1254
        %v1256 = vpop.f32.mrb[0].mxu0
        %1257 = vmatprep.mubr.f32.mxu0 0.0
        %1258 = vmatmul.mubr.f32.gmra.mrb[0].mxu0 %v1119
        %v1259 = vpop.f32.mrb[0].mxu0
        %v1260 = vadd.f32 0.0, %v1259
        %v1261 = vpop.f32.mrb[0].mxu0
        %1262 = vmatprep.mubr.f32.mxu0 0.0
        %1263 = vmatmul.mubr.f32.gmra.mrb[0].mxu0 %v1121
        %v1264 = vpop.f32.mrb[0].mxu0
        %v1265 = vadd.f32 0.0, %v1264
        %v1266 = vpop.f32.mrb[0].mxu0
        %1267 = vdwg.mxu0
        %v1268 = vld [vmem:[#allocation7] sm:$0xff]
        %v1269 = vld [vmem:[#allocation7 + $0x8] sm:$0xff]
        %v1270 = vld [vmem:[#allocation7 + $0x10] sm:$0xff]
        %v1271 = vld [vmem:[#allocation7 + $0x18] sm:$0xff]
        %v1272 = vld [vmem:[#allocation7 + $0x20] sm:$0xff]
        %v1273 = vld [vmem:[#allocation7 + $0x28] sm:$0xff]
        %v1274 = vld [vmem:[#allocation7 + $0x30] sm:$0xff]
        %v1275 = vld [vmem:[#allocation7 + $0x38] sm:$0xff]
        %v1276 = vld [vmem:[#allocation7 + $0x40] sm:$0xff]
        %v1277 = vld [vmem:[#allocation7 + $0x48] sm:$0xff]
        %v1278 = vld [vmem:[#allocation7 + $0x50] sm:$0xff]
        %v1279 = vld [vmem:[#allocation7 + $0x58] sm:$0xff]
        %v1280 = vld [vmem:[#allocation7 + $0x60] sm:$0xff]
        %v1281 = vld [vmem:[#allocation7 + $0x68] sm:$0xff]
        %v1282 = vld [vmem:[#allocation7 + $0x70] sm:$0xff]
        %v1283 = vld [vmem:[#allocation7 + $0x78] sm:$0xff]
        %v1284 = vld [vmem:[#allocation7 + $0x80] sm:$0xff]
        %v1285 = vld [vmem:[#allocation7 + $0x88] sm:$0xff]
        %v1286 = vld [vmem:[#allocation7 + $0x90] sm:$0xff]
        %v1287 = vld [vmem:[#allocation7 + $0x98] sm:$0xff]
        %v1288 = vld [vmem:[#allocation7 + $0xa0] sm:$0xff]
        %v1289 = vld [vmem:[#allocation7 + $0xa8] sm:$0xff]
        %v1290 = vld [vmem:[#allocation7 + $0xb0] sm:$0xff]
        %v1291 = vld [vmem:[#allocation7 + $0xb8] sm:$0xff]
        %v1292 = vld [vmem:[#allocation7 + $0xc0] sm:$0xff]
        %v1293 = vld [vmem:[#allocation7 + $0xc8] sm:$0xff]
        %v1294 = vld [vmem:[#allocation7 + $0xd0] sm:$0xff]
        %v1295 = vld [vmem:[#allocation7 + $0xd8] sm:$0xff]
        %v1296 = vld [vmem:[#allocation7 + $0xe0] sm:$0xff]
        %v1297 = vld [vmem:[#allocation7 + $0xe8] sm:$0xff]
        %v1298 = vld [vmem:[#allocation7 + $0xf0] sm:$0xff]
        %v1299 = vld [vmem:[#allocation7 + $0xf8] sm:$0xff]
        %v1300 = vld [vmem:[#allocation7 + $0x100] sm:$0xff]
        %v1301 = vld [vmem:[#allocation7 + $0x108] sm:$0xff]
        %v1302 = vld [vmem:[#allocation7 + $0x110] sm:$0xff]
        %v1303 = vld [vmem:[#allocation7 + $0x118] sm:$0xff]
        %v1304 = vld [vmem:[#allocation7 + $0x120] sm:$0xff]
        %v1305 = vld [vmem:[#allocation7 + $0x128] sm:$0xff]
        %v1306 = vld [vmem:[#allocation7 + $0x130] sm:$0xff]
        %v1307 = vld [vmem:[#allocation7 + $0x138] sm:$0xff]
        %v1308 = vld [vmem:[#allocation7 + $0x140] sm:$0xff]
        %v1309 = vld [vmem:[#allocation7 + $0x148] sm:$0xff]
        %v1310 = vld [vmem:[#allocation7 + $0x150] sm:$0xff]
        %v1311 = vld [vmem:[#allocation7 + $0x158] sm:$0xff]
        %v1312 = vld [vmem:[#allocation7 + $0x160] sm:$0xff]
        %v1313 = vld [vmem:[#allocation7 + $0x168] sm:$0xff]
        %v1314 = vld [vmem:[#allocation7 + $0x170] sm:$0xff]
        %v1315 = vld [vmem:[#allocation7 + $0x178] sm:$0xff]
        %v1316 = vld [vmem:[#allocation7 + $0x180] sm:$0xff]
        %v1317 = vld [vmem:[#allocation7 + $0x188] sm:$0xff]
        %v1318 = vld [vmem:[#allocation7 + $0x190] sm:$0xff]
        %v1319 = vld [vmem:[#allocation7 + $0x198] sm:$0xff]
        %v1320 = vld [vmem:[#allocation7 + $0x1a0] sm:$0xff]
        %v1321 = vld [vmem:[#allocation7 + $0x1a8] sm:$0xff]
        %v1322 = vld [vmem:[#allocation7 + $0x1b0] sm:$0xff]
        %v1323 = vld [vmem:[#allocation7 + $0x1b8] sm:$0xff]
        %v1324 = vld [vmem:[#allocation7 + $0x1c0] sm:$0xff]
        %v1325 = vld [vmem:[#allocation7 + $0x1c8] sm:$0xff]
        %v1326 = vld [vmem:[#allocation7 + $0x1d0] sm:$0xff]
        %v1327 = vld [vmem:[#allocation7 + $0x1d8] sm:$0xff]
        %v1328 = vld [vmem:[#allocation7 + $0x1e0] sm:$0xff]
        %v1329 = vld [vmem:[#allocation7 + $0x1e8] sm:$0xff]
        %v1330 = vld [vmem:[#allocation7 + $0x1f0] sm:$0xff]
        %v1331 = vld [vmem:[#allocation7 + $0x1f8] sm:$0xff]
        %1332 = vmatprep.subr.mxu0 0.0
        %1333 = vmatpush1.msra.mxu0 %v1190
        %1334 = vmatprep.subr.mxu0 0.0
        %1335 = vmatpush1.msra.mxu0 %v1195
        %1336 = vmatprep.subr.mxu0 0.0
        %1337 = vmatpush1.msra.mxu0 %v1200
        %1338 = vmatprep.subr.mxu0 0.0
        %1339 = vmatpush1.msra.mxu0 %v1205
        %1340 = vmatprep.subr.mxu0 0.0
        %1341 = vmatpush1.msra.mxu0 %v1210
        %1342 = vmatprep.subr.mxu0 0.0
        %1343 = vmatpush1.msra.mxu0 %v1215
        %1344 = vmatprep.subr.mxu0 0.0
        %1345 = vmatpush1.msra.mxu0 %v1220
        %1346 = vmatprep.subr.mxu0 0.0
        %1347 = vmatpush1.msra.mxu0 %v1225
        %1348 = vmatprep.subr.mxu0 0.0
        %1349 = vmatpush1.msra.mxu0 %v1230
        %1350 = vmatprep.subr.mxu0 0.0
        %1351 = vmatpush1.msra.mxu0 %v1235
        %1352 = vmatprep.subr.mxu0 0.0
        %1353 = vmatpush1.msra.mxu0 %v1240
        %1354 = vmatprep.subr.mxu0 0.0
        %1355 = vmatpush1.msra.mxu0 %v1245
        %1356 = vmatprep.subr.mxu0 0.0
        %1357 = vmatpush1.msra.mxu0 %v1250
        %1358 = vmatprep.subr.mxu0 0.0
        %1359 = vmatpush1.msra.mxu0 %v1255
        %1360 = vmatprep.subr.mxu0 0.0
        %1361 = vmatpush1.msra.mxu0 %v1260
        %1362 = vmatprep.subr.mxu0 0.0
        %1363 = vmatpush1.msra.mxu0 %v1265
        %1364 = vmatprep.subr.mxu0 0.0
        %1365 = vmatpush1.msra.mxu0 0.0
        %1366 = vmatprep.subr.mxu0 0.0
        %1367 = vmatpush1.msra.mxu0 0.0
        %1368 = vmatprep.subr.mxu0 0.0
        %1369 = vmatpush1.msra.mxu0 0.0
        %1370 = vmatprep.subr.mxu0 0.0
        %1371 = vmatpush1.msra.mxu0 0.0
        %1372 = vmatprep.subr.mxu0 0.0
        %1373 = vmatpush1.msra.mxu0 0.0
        %1374 = vmatprep.subr.mxu0 0.0
        %1375 = vmatpush1.msra.mxu0 0.0
        %1376 = vmatprep.subr.mxu0 0.0
        %1377 = vmatpush1.msra.mxu0 0.0
        %1378 = vmatprep.subr.mxu0 0.0
        %1379 = vmatpush1.msra.mxu0 0.0
        %1380 = vmatprep.subr.mxu0 0.0
        %1381 = vmatpush1.msra.mxu0 0.0
        %1382 = vmatprep.subr.mxu0 0.0
        %1383 = vmatpush1.msra.mxu0 0.0
        %1384 = vmatprep.subr.mxu0 0.0
        %1385 = vmatpush1.msra.mxu0 0.0
        %1386 = vmatprep.subr.mxu0 0.0
        %1387 = vmatpush1.msra.mxu0 0.0
        %1388 = vmatprep.subr.mxu0 0.0
        %1389 = vmatpush1.msra.mxu0 0.0
        %1390 = vmatprep.subr.mxu0 0.0
        %1391 = vmatpush1.msra.mxu0 0.0
        %1392 = vmatprep.subr.mxu0 0.0
        %1393 = vmatpush1.msra.mxu0 0.0
        %1394 = vmatprep.subr.mxu0 0.0
        %1395 = vmatpush1.msra.mxu0 0.0
        %1396 = vmatprep.mubr.f32.mxu0 0.0
        %1397 = vmatmul.mubr.f32.gmra.mrb[0].mxu0 %v1268
        %v1398 = vpop.f32.mrb[0].mxu0
        %v1399 = vadd.f32 0.0, %v1398
        %v1400 = vpop.f32.mrb[0].mxu0
        %1401 = vmatprep.mubr.f32.mxu0 0.0
        %1402 = vmatmul.mubr.f32.gmra.mrb[0].mxu0 %v1269
        %v1403 = vpop.f32.mrb[0].mxu0
        %v1404 = vadd.f32 0.0, %v1403
        %v1405 = vpop.f32.mrb[0].mxu0
        %1406 = vmatprep.mubr.f32.mxu0 0.0
        %1407 = vmatmul.mubr.f32.gmra.mrb[0].mxu0 %v1270
        %v1408 = vpop.f32.mrb[0].mxu0
        %v1409 = vadd.f32 0.0, %v1408
        %v1410 = vpop.f32.mrb[0].mxu0
        %1411 = vmatprep.mubr.f32.mxu0 0.0
        %1412 = vmatmul.mubr.f32.gmra.mrb[0].mxu0 %v1271
        %v1413 = vpop.f32.mrb[0].mxu0
        %v1414 = vadd.f32 0.0, %v1413
        %v1415 = vpop.f32.mrb[0].mxu0
        %1416 = vmatprep.mubr.f32.mxu0 0.0
        %1417 = vmatmul.mubr.f32.gmra.mrb[0].mxu0 %v1272
        %v1418 = vpop.f32.mrb[0].mxu0
        %v1419 = vadd.f32 0.0, %v1418
        %v1420 = vpop.f32.mrb[0].mxu0
        %1421 = vmatprep.mubr.f32.mxu0 0.0
        %1422 = vmatmul.mubr.f32.gmra.mrb[0].mxu0 %v1273
        %v1423 = vpop.f32.mrb[0].mxu0
        %v1424 = vadd.f32 0.0, %v1423
        %v1425 = vpop.f32.mrb[0].mxu0
        %1426 = vmatprep.mubr.f32.mxu0 0.0
        %1427 = vmatmul.mubr.f32.gmra.mrb[0].mxu0 %v1274
        %v1428 = vpop.f32.mrb[0].mxu0
        %v1429 = vadd.f32 0.0, %v1428
        %v1430 = vpop.f32.mrb[0].mxu0
        %1431 = vmatprep.mubr.f32.mxu0 0.0
        %1432 = vmatmul.mubr.f32.gmra.mrb[0].mxu0 %v1275
        %v1433 = vpop.f32.mrb[0].mxu0
        %v1434 = vadd.f32 0.0, %v1433
        %v1435 = vpop.f32.mrb[0].mxu0
        %1436 = vmatprep.mubr.f32.mxu0 0.0
        %1437 = vmatmul.mubr.f32.gmra.mrb[0].mxu0 %v1276
        %v1438 = vpop.f32.mrb[0].mxu0
        %v1439 = vadd.f32 0.0, %v1438
        %v1440 = vpop.f32.mrb[0].mxu0
        %1441 = vmatprep.mubr.f32.mxu0 0.0
        %1442 = vmatmul.mubr.f32.gmra.mrb[0].mxu0 %v1277
        %v1443 = vpop.f32.mrb[0].mxu0
        %v1444 = vadd.f32 0.0, %v1443
        %v1445 = vpop.f32.mrb[0].mxu0
        %1446 = vmatprep.mubr.f32.mxu0 0.0
        %1447 = vmatmul.mubr.f32.gmra.mrb[0].mxu0 %v1278
        %v1448 = vpop.f32.mrb[0].mxu0
        %v1449 = vadd.f32 0.0, %v1448
        %v1450 = vpop.f32.mrb[0].mxu0
        %1451 = vmatprep.mubr.f32.mxu0 0.0
        %1452 = vmatmul.mubr.f32.gmra.mrb[0].mxu0 %v1279
        %v1453 = vpop.f32.mrb[0].mxu0
        %v1454 = vadd.f32 0.0, %v1453
        %v1455 = vpop.f32.mrb[0].mxu0
        %1456 = vmatprep.mubr.f32.mxu0 0.0
        %1457 = vmatmul.mubr.f32.gmra.mrb[0].mxu0 %v1280
        %v1458 = vpop.f32.mrb[0].mxu0
        %v1459 = vadd.f32 0.0, %v1458
        %v1460 = vpop.f32.mrb[0].mxu0
        %1461 = vmatprep.mubr.f32.mxu0 0.0
        %1462 = vmatmul.mubr.f32.gmra.mrb[0].mxu0 %v1281
        %v1463 = vpop.f32.mrb[0].mxu0
        %v1464 = vadd.f32 0.0, %v1463
        %v1465 = vpop.f32.mrb[0].mxu0
        %1466 = vmatprep.mubr.f32.mxu0 0.0
        %1467 = vmatmul.mubr.f32.gmra.mrb[0].mxu0 %v1282
        %v1468 = vpop.f32.mrb[0].mxu0
        %v1469 = vadd.f32 0.0, %v1468
        %v1470 = vpop.f32.mrb[0].mxu0
        %1471 = vmatprep.mubr.f32.mxu0 0.0
        %1472 = vmatmul.mubr.f32.gmra.mrb[0].mxu0 %v1283
        %v1473 = vpop.f32.mrb[0].mxu0
        %v1474 = vadd.f32 0.0, %v1473
        %v1475 = vpop.f32.mrb[0].mxu0
        %1476 = vmatprep.mubr.f32.mxu0 0.0
        %1477 = vmatmul.mubr.f32.gmra.mrb[0].mxu0 %v1284
        %v1478 = vpop.f32.mrb[0].mxu0
        %v1479 = vadd.f32 0.0, %v1478
        %v1480 = vpop.f32.mrb[0].mxu0
        %1481 = vmatprep.mubr.f32.mxu0 0.0
        %1482 = vmatmul.mubr.f32.gmra.mrb[0].mxu0 %v1285
        %v1483 = vpop.f32.mrb[0].mxu0
        %v1484 = vadd.f32 0.0, %v1483
        %v1485 = vpop.f32.mrb[0].mxu0
        %1486 = vmatprep.mubr.f32.mxu0 0.0
        %1487 = vmatmul.mubr.f32.gmra.mrb[0].mxu0 %v1286
        %v1488 = vpop.f32.mrb[0].mxu0
        %v1489 = vadd.f32 0.0, %v1488
        %v1490 = vpop.f32.mrb[0].mxu0
        %1491 = vmatprep.mubr.f32.mxu0 0.0
        %1492 = vmatmul.mubr.f32.gmra.mrb[0].mxu0 %v1287
        %v1493 = vpop.f32.mrb[0].mxu0
        %v1494 = vadd.f32 0.0, %v1493
        %v1495 = vpop.f32.mrb[0].mxu0
        %1496 = vmatprep.mubr.f32.mxu0 0.0
        %1497 = vmatmul.mubr.f32.gmra.mrb[0].mxu0 %v1288
        %v1498 = vpop.f32.mrb[0].mxu0
        %v1499 = vadd.f32 0.0, %v1498
        %v1500 = vpop.f32.mrb[0].mxu0
        %1501 = vmatprep.mubr.f32.mxu0 0.0
        %1502 = vmatmul.mubr.f32.gmra.mrb[0].mxu0 %v1289
        %v1503 = vpop.f32.mrb[0].mxu0
        %v1504 = vadd.f32 0.0, %v1503
        %v1505 = vpop.f32.mrb[0].mxu0
        %1506 = vmatprep.mubr.f32.mxu0 0.0
        %1507 = vmatmul.mubr.f32.gmra.mrb[0].mxu0 %v1290
        %v1508 = vpop.f32.mrb[0].mxu0
        %v1509 = vadd.f32 0.0, %v1508
        %v1510 = vpop.f32.mrb[0].mxu0
        %1511 = vmatprep.mubr.f32.mxu0 0.0
        %1512 = vmatmul.mubr.f32.gmra.mrb[0].mxu0 %v1291
        %v1513 = vpop.f32.mrb[0].mxu0
        %v1514 = vadd.f32 0.0, %v1513
        %v1515 = vpop.f32.mrb[0].mxu0
        %1516 = vmatprep.mubr.f32.mxu0 0.0
        %1517 = vmatmul.mubr.f32.gmra.mrb[0].mxu0 %v1292
        %v1518 = vpop.f32.mrb[0].mxu0
        %v1519 = vadd.f32 0.0, %v1518
        %v1520 = vpop.f32.mrb[0].mxu0
        %1521 = vmatprep.mubr.f32.mxu0 0.0
        %1522 = vmatmul.mubr.f32.gmra.mrb[0].mxu0 %v1293
        %v1523 = vpop.f32.mrb[0].mxu0
        %v1524 = vadd.f32 0.0, %v1523
        %v1525 = vpop.f32.mrb[0].mxu0
        %1526 = vmatprep.mubr.f32.mxu0 0.0
        %1527 = vmatmul.mubr.f32.gmra.mrb[0].mxu0 %v1294
        %v1528 = vpop.f32.mrb[0].mxu0
        %v1529 = vadd.f32 0.0, %v1528
        %v1530 = vpop.f32.mrb[0].mxu0
        %1531 = vmatprep.mubr.f32.mxu0 0.0
        %1532 = vmatmul.mubr.f32.gmra.mrb[0].mxu0 %v1295
        %v1533 = vpop.f32.mrb[0].mxu0
        %v1534 = vadd.f32 0.0, %v1533
        %v1535 = vpop.f32.mrb[0].mxu0
        %1536 = vmatprep.mubr.f32.mxu0 0.0
        %1537 = vmatmul.mubr.f32.gmra.mrb[0].mxu0 %v1296
        %v1538 = vpop.f32.mrb[0].mxu0
        %v1539 = vadd.f32 0.0, %v1538
        %v1540 = vpop.f32.mrb[0].mxu0
        %1541 = vmatprep.mubr.f32.mxu0 0.0
        %1542 = vmatmul.mubr.f32.gmra.mrb[0].mxu0 %v1297
        %v1543 = vpop.f32.mrb[0].mxu0
        %v1544 = vadd.f32 0.0, %v1543
        %v1545 = vpop.f32.mrb[0].mxu0
        %1546 = vmatprep.mubr.f32.mxu0 0.0
        %1547 = vmatmul.mubr.f32.gmra.mrb[0].mxu0 %v1298
        %v1548 = vpop.f32.mrb[0].mxu0
        %v1549 = vadd.f32 0.0, %v1548
        %v1550 = vpop.f32.mrb[0].mxu0
        %1551 = vmatprep.mubr.f32.mxu0 0.0
        %1552 = vmatmul.mubr.f32.gmra.mrb[0].mxu0 %v1299
        %v1553 = vpop.f32.mrb[0].mxu0
        %v1554 = vadd.f32 0.0, %v1553
        %v1555 = vpop.f32.mrb[0].mxu0
        %1556 = vmatprep.mubr.f32.mxu0 0.0
        %1557 = vmatmul.mubr.f32.gmra.mrb[0].mxu0 %v1300
        %v1558 = vpop.f32.mrb[0].mxu0
        %v1559 = vadd.f32 0.0, %v1558
        %v1560 = vpop.f32.mrb[0].mxu0
        %1561 = vmatprep.mubr.f32.mxu0 0.0
        %1562 = vmatmul.mubr.f32.gmra.mrb[0].mxu0 %v1301
        %v1563 = vpop.f32.mrb[0].mxu0
        %v1564 = vadd.f32 0.0, %v1563
        %v1565 = vpop.f32.mrb[0].mxu0
        %1566 = vmatprep.mubr.f32.mxu0 0.0
        %1567 = vmatmul.mubr.f32.gmra.mrb[0].mxu0 %v1302
        %v1568 = vpop.f32.mrb[0].mxu0
        %v1569 = vadd.f32 0.0, %v1568
        %v1570 = vpop.f32.mrb[0].mxu0
        %1571 = vmatprep.mubr.f32.mxu0 0.0
        %1572 = vmatmul.mubr.f32.gmra.mrb[0].mxu0 %v1303
        %v1573 = vpop.f32.mrb[0].mxu0
        %v1574 = vadd.f32 0.0, %v1573
        %v1575 = vpop.f32.mrb[0].mxu0
        %1576 = vmatprep.mubr.f32.mxu0 0.0
        %1577 = vmatmul.mubr.f32.gmra.mrb[0].mxu0 %v1304
        %v1578 = vpop.f32.mrb[0].mxu0
        %v1579 = vadd.f32 0.0, %v1578
        %v1580 = vpop.f32.mrb[0].mxu0
        %1581 = vmatprep.mubr.f32.mxu0 0.0
        %1582 = vmatmul.mubr.f32.gmra.mrb[0].mxu0 %v1305
        %v1583 = vpop.f32.mrb[0].mxu0
        %v1584 = vadd.f32 0.0, %v1583
        %v1585 = vpop.f32.mrb[0].mxu0
        %1586 = vmatprep.mubr.f32.mxu0 0.0
        %1587 = vmatmul.mubr.f32.gmra.mrb[0].mxu0 %v1306
        %v1588 = vpop.f32.mrb[0].mxu0
        %v1589 = vadd.f32 0.0, %v1588
        %v1590 = vpop.f32.mrb[0].mxu0
        %1591 = vmatprep.mubr.f32.mxu0 0.0
        %1592 = vmatmul.mubr.f32.gmra.mrb[0].mxu0 %v1307
        %v1593 = vpop.f32.mrb[0].mxu0
        %v1594 = vadd.f32 0.0, %v1593
        %v1595 = vpop.f32.mrb[0].mxu0
        %1596 = vmatprep.mubr.f32.mxu0 0.0
        %1597 = vmatmul.mubr.f32.gmra.mrb[0].mxu0 %v1308
        %v1598 = vpop.f32.mrb[0].mxu0
        %v1599 = vadd.f32 0.0, %v1598
        %v1600 = vpop.f32.mrb[0].mxu0
        %1601 = vmatprep.mubr.f32.mxu0 0.0
        %1602 = vmatmul.mubr.f32.gmra.mrb[0].mxu0 %v1309
        %v1603 = vpop.f32.mrb[0].mxu0
        %v1604 = vadd.f32 0.0, %v1603
        %v1605 = vpop.f32.mrb[0].mxu0
        %1606 = vmatprep.mubr.f32.mxu0 0.0
        %1607 = vmatmul.mubr.f32.gmra.mrb[0].mxu0 %v1310
        %v1608 = vpop.f32.mrb[0].mxu0
        %v1609 = vadd.f32 0.0, %v1608
        %v1610 = vpop.f32.mrb[0].mxu0
        %1611 = vmatprep.mubr.f32.mxu0 0.0
        %1612 = vmatmul.mubr.f32.gmra.mrb[0].mxu0 %v1311
        %v1613 = vpop.f32.mrb[0].mxu0
        %v1614 = vadd.f32 0.0, %v1613
        %v1615 = vpop.f32.mrb[0].mxu0
        %1616 = vmatprep.mubr.f32.mxu0 0.0
        %1617 = vmatmul.mubr.f32.gmra.mrb[0].mxu0 %v1312
        %v1618 = vpop.f32.mrb[0].mxu0
        %v1619 = vadd.f32 0.0, %v1618
        %v1620 = vpop.f32.mrb[0].mxu0
        %1621 = vmatprep.mubr.f32.mxu0 0.0
        %1622 = vmatmul.mubr.f32.gmra.mrb[0].mxu0 %v1313
        %v1623 = vpop.f32.mrb[0].mxu0
        %v1624 = vadd.f32 0.0, %v1623
        %v1625 = vpop.f32.mrb[0].mxu0
        %1626 = vmatprep.mubr.f32.mxu0 0.0
        %1627 = vmatmul.mubr.f32.gmra.mrb[0].mxu0 %v1314
        %v1628 = vpop.f32.mrb[0].mxu0
        %v1629 = vadd.f32 0.0, %v1628
        %v1630 = vpop.f32.mrb[0].mxu0
        %1631 = vmatprep.mubr.f32.mxu0 0.0
        %1632 = vmatmul.mubr.f32.gmra.mrb[0].mxu0 %v1315
        %v1633 = vpop.f32.mrb[0].mxu0
        %v1634 = vadd.f32 0.0, %v1633
        %v1635 = vpop.f32.mrb[0].mxu0
        %1636 = vmatprep.mubr.f32.mxu0 0.0
        %1637 = vmatmul.mubr.f32.gmra.mrb[0].mxu0 %v1316
        %v1638 = vpop.f32.mrb[0].mxu0
        %v1639 = vadd.f32 0.0, %v1638
        %v1640 = vpop.f32.mrb[0].mxu0
        %1641 = vmatprep.mubr.f32.mxu0 0.0
        %1642 = vmatmul.mubr.f32.gmra.mrb[0].mxu0 %v1317
        %v1643 = vpop.f32.mrb[0].mxu0
        %v1644 = vadd.f32 0.0, %v1643
        %v1645 = vpop.f32.mrb[0].mxu0
        %1646 = vmatprep.mubr.f32.mxu0 0.0
        %1647 = vmatmul.mubr.f32.gmra.mrb[0].mxu0 %v1318
        %v1648 = vpop.f32.mrb[0].mxu0
        %v1649 = vadd.f32 0.0, %v1648
        %v1650 = vpop.f32.mrb[0].mxu0
        %1651 = vmatprep.mubr.f32.mxu0 0.0
        %1652 = vmatmul.mubr.f32.gmra.mrb[0].mxu0 %v1319
        %v1653 = vpop.f32.mrb[0].mxu0
        %v1654 = vadd.f32 0.0, %v1653
        %v1655 = vpop.f32.mrb[0].mxu0
        %1656 = vmatprep.mubr.f32.mxu0 0.0
        %1657 = vmatmul.mubr.f32.gmra.mrb[0].mxu0 %v1320
        %v1658 = vpop.f32.mrb[0].mxu0
        %v1659 = vadd.f32 0.0, %v1658
        %v1660 = vpop.f32.mrb[0].mxu0
        %1661 = vmatprep.mubr.f32.mxu0 0.0
        %1662 = vmatmul.mubr.f32.gmra.mrb[0].mxu0 %v1321
        %v1663 = vpop.f32.mrb[0].mxu0
        %v1664 = vadd.f32 0.0, %v1663
        %v1665 = vpop.f32.mrb[0].mxu0
        %1666 = vmatprep.mubr.f32.mxu0 0.0
        %1667 = vmatmul.mubr.f32.gmra.mrb[0].mxu0 %v1322
        %v1668 = vpop.f32.mrb[0].mxu0
        %v1669 = vadd.f32 0.0, %v1668
        %v1670 = vpop.f32.mrb[0].mxu0
        %1671 = vmatprep.mubr.f32.mxu0 0.0
        %1672 = vmatmul.mubr.f32.gmra.mrb[0].mxu0 %v1323
        %v1673 = vpop.f32.mrb[0].mxu0
        %v1674 = vadd.f32 0.0, %v1673
        %v1675 = vpop.f32.mrb[0].mxu0
        %1676 = vmatprep.mubr.f32.mxu0 0.0
        %1677 = vmatmul.mubr.f32.gmra.mrb[0].mxu0 %v1324
        %v1678 = vpop.f32.mrb[0].mxu0
        %v1679 = vadd.f32 0.0, %v1678
        %v1680 = vpop.f32.mrb[0].mxu0
        %1681 = vmatprep.mubr.f32.mxu0 0.0
        %1682 = vmatmul.mubr.f32.gmra.mrb[0].mxu0 %v1325
        %v1683 = vpop.f32.mrb[0].mxu0
        %v1684 = vadd.f32 0.0, %v1683
        %v1685 = vpop.f32.mrb[0].mxu0
        %1686 = vmatprep.mubr.f32.mxu0 0.0
        %1687 = vmatmul.mubr.f32.gmra.mrb[0].mxu0 %v1326
        %v1688 = vpop.f32.mrb[0].mxu0
        %v1689 = vadd.f32 0.0, %v1688
        %v1690 = vpop.f32.mrb[0].mxu0
        %1691 = vmatprep.mubr.f32.mxu0 0.0
        %1692 = vmatmul.mubr.f32.gmra.mrb[0].mxu0 %v1327
        %v1693 = vpop.f32.mrb[0].mxu0
        %v1694 = vadd.f32 0.0, %v1693
        %v1695 = vpop.f32.mrb[0].mxu0
        %1696 = vmatprep.mubr.f32.mxu0 0.0
        %1697 = vmatmul.mubr.f32.gmra.mrb[0].mxu0 %v1328
        %v1698 = vpop.f32.mrb[0].mxu0
        %v1699 = vadd.f32 0.0, %v1698
        %v1700 = vpop.f32.mrb[0].mxu0
        %1701 = vmatprep.mubr.f32.mxu0 0.0
        %1702 = vmatmul.mubr.f32.gmra.mrb[0].mxu0 %v1329
        %v1703 = vpop.f32.mrb[0].mxu0
        %v1704 = vadd.f32 0.0, %v1703
        %v1705 = vpop.f32.mrb[0].mxu0
        %1706 = vmatprep.mubr.f32.mxu0 0.0
        %1707 = vmatmul.mubr.f32.gmra.mrb[0].mxu0 %v1330
        %v1708 = vpop.f32.mrb[0].mxu0
        %v1709 = vadd.f32 0.0, %v1708
        %v1710 = vpop.f32.mrb[0].mxu0
        %1711 = vmatprep.mubr.f32.mxu0 0.0
        %1712 = vmatmul.mubr.f32.gmra.mrb[0].mxu0 %v1331
        %v1713 = vpop.f32.mrb[0].mxu0
        %v1714 = vadd.f32 0.0, %v1713
        %v1715 = vpop.f32.mrb[0].mxu0
        %1716 = vdwg.mxu0
        %vm1717 = vcmask 523264
        %1718 = vst.msk [vmem:[%s364] sm:$0xff] %vm1717, %v1399
        %1719 = vst.msk [vmem:[%s364 + $0x8] sm:$0xff] %vm1717, %v1404
        %1720 = vst.msk [vmem:[%s364 + $0x10] sm:$0xff] %vm1717, %v1409
        %1721 = vst.msk [vmem:[%s364 + $0x18] sm:$0xff] %vm1717, %v1414
        %1722 = vst.msk [vmem:[%s364 + $0x20] sm:$0xff] %vm1717, %v1419
        %1723 = vst.msk [vmem:[%s364 + $0x28] sm:$0xff] %vm1717, %v1424
        %1724 = vst.msk [vmem:[%s364 + $0x30] sm:$0xff] %vm1717, %v1429
        %1725 = vst.msk [vmem:[%s364 + $0x38] sm:$0xff] %vm1717, %v1434
        %1726 = vst.msk [vmem:[%s364 + $0x40] sm:$0xff] %vm1717, %v1439
        %1727 = vst.msk [vmem:[%s364 + $0x48] sm:$0xff] %vm1717, %v1444
        %1728 = vst.msk [vmem:[%s364 + $0x50] sm:$0xff] %vm1717, %v1449
        %1729 = vst.msk [vmem:[%s364 + $0x58] sm:$0xff] %vm1717, %v1454
        %1730 = vst.msk [vmem:[%s364 + $0x60] sm:$0xff] %vm1717, %v1459
        %1731 = vst.msk [vmem:[%s364 + $0x68] sm:$0xff] %vm1717, %v1464
        %1732 = vst.msk [vmem:[%s364 + $0x70] sm:$0xff] %vm1717, %v1469
        %1733 = vst.msk [vmem:[%s364 + $0x78] sm:$0xff] %vm1717, %v1474
        %1734 = vst.msk [vmem:[%s364 + $0x80] sm:$0xff] %vm1717, %v1479
        %1735 = vst.msk [vmem:[%s364 + $0x88] sm:$0xff] %vm1717, %v1484
        %1736 = vst.msk [vmem:[%s364 + $0x90] sm:$0xff] %vm1717, %v1489
        %1737 = vst.msk [vmem:[%s364 + $0x98] sm:$0xff] %vm1717, %v1494
        %1738 = vst.msk [vmem:[%s364 + $0xa0] sm:$0xff] %vm1717, %v1499
        %1739 = vst.msk [vmem:[%s364 + $0xa8] sm:$0xff] %vm1717, %v1504
        %1740 = vst.msk [vmem:[%s364 + $0xb0] sm:$0xff] %vm1717, %v1509
        %1741 = vst.msk [vmem:[%s364 + $0xb8] sm:$0xff] %vm1717, %v1514
        %1742 = vst.msk [vmem:[%s364 + $0xc0] sm:$0xff] %vm1717, %v1519
        %1743 = vst.msk [vmem:[%s364 + $0xc8] sm:$0xff] %vm1717, %v1524
        %1744 = vst.msk [vmem:[%s364 + $0xd0] sm:$0xff] %vm1717, %v1529
        %1745 = vst.msk [vmem:[%s364 + $0xd8] sm:$0xff] %vm1717, %v1534
        %1746 = vst.msk [vmem:[%s364 + $0xe0] sm:$0xff] %vm1717, %v1539
        %1747 = vst.msk [vmem:[%s364 + $0xe8] sm:$0xff] %vm1717, %v1544
        %1748 = vst.msk [vmem:[%s364 + $0xf0] sm:$0xff] %vm1717, %v1549
        %1749 = vst.msk [vmem:[%s364 + $0xf8] sm:$0xff] %vm1717, %v1554
        %1750 = vst.msk [vmem:[%s364 + $0x100] sm:$0xff] %vm1717, %v1559
        %1751 = vst.msk [vmem:[%s364 + $0x108] sm:$0xff] %vm1717, %v1564
        %1752 = vst.msk [vmem:[%s364 + $0x110] sm:$0xff] %vm1717, %v1569
        %1753 = vst.msk [vmem:[%s364 + $0x118] sm:$0xff] %vm1717, %v1574
        %1754 = vst.msk [vmem:[%s364 + $0x120] sm:$0xff] %vm1717, %v1579
        %1755 = vst.msk [vmem:[%s364 + $0x128] sm:$0xff] %vm1717, %v1584
        %1756 = vst.msk [vmem:[%s364 + $0x130] sm:$0xff] %vm1717, %v1589
        %1757 = vst.msk [vmem:[%s364 + $0x138] sm:$0xff] %vm1717, %v1594
        %1758 = vst.msk [vmem:[%s364 + $0x140] sm:$0xff] %vm1717, %v1599
        %1759 = vst.msk [vmem:[%s364 + $0x148] sm:$0xff] %vm1717, %v1604
        %1760 = vst.msk [vmem:[%s364 + $0x150] sm:$0xff] %vm1717, %v1609
        %1761 = vst.msk [vmem:[%s364 + $0x158] sm:$0xff] %vm1717, %v1614
        %1762 = vst.msk [vmem:[%s364 + $0x160] sm:$0xff] %vm1717, %v1619
        %1763 = vst.msk [vmem:[%s364 + $0x168] sm:$0xff] %vm1717, %v1624
        %1764 = vst.msk [vmem:[%s364 + $0x170] sm:$0xff] %vm1717, %v1629
        %1765 = vst.msk [vmem:[%s364 + $0x178] sm:$0xff] %vm1717, %v1634
        %1766 = vst.msk [vmem:[%s364 + $0x180] sm:$0xff] %vm1717, %v1639
        %1767 = vst.msk [vmem:[%s364 + $0x188] sm:$0xff] %vm1717, %v1644
        %1768 = vst.msk [vmem:[%s364 + $0x190] sm:$0xff] %vm1717, %v1649
        %1769 = vst.msk [vmem:[%s364 + $0x198] sm:$0xff] %vm1717, %v1654
        %1770 = vst.msk [vmem:[%s364 + $0x1a0] sm:$0xff] %vm1717, %v1659
        %1771 = vst.msk [vmem:[%s364 + $0x1a8] sm:$0xff] %vm1717, %v1664
        %1772 = vst.msk [vmem:[%s364 + $0x1b0] sm:$0xff] %vm1717, %v1669
        %1773 = vst.msk [vmem:[%s364 + $0x1b8] sm:$0xff] %vm1717, %v1674
        %1774 = vst.msk [vmem:[%s364 + $0x1c0] sm:$0xff] %vm1717, %v1679
        %1775 = vst.msk [vmem:[%s364 + $0x1c8] sm:$0xff] %vm1717, %v1684
        %1776 = vst.msk [vmem:[%s364 + $0x1d0] sm:$0xff] %vm1717, %v1689
        %1777 = vst.msk [vmem:[%s364 + $0x1d8] sm:$0xff] %vm1717, %v1694
        %1778 = vst.msk [vmem:[%s364 + $0x1e0] sm:$0xff] %vm1717, %v1699
        %1779 = vst.msk [vmem:[%s364 + $0x1e8] sm:$0xff] %vm1717, %v1704
        %1780 = vst.msk [vmem:[%s364 + $0x1f0] sm:$0xff] %vm1717, %v1709
        %1781 = vst.msk [vmem:[%s364 + $0x1f8] sm:$0xff] %vm1717, %v1714
        %p1782 = scmp.lt.s32.totalorder %s22, 1
        %s1783 = scalar_select %p1782, %s22, 1
        %s1784 = smul.addr %s1783, 64
        %s1785 = smul.addr %s1784, 8
        %s1786 = scalar_lea.vmem %s8, %s1785
        // Predicated region
        $region69: #{tpu_custom_call.1} parent=51 // pred_check
          %p1787 = pneg %p213
        $region70: #{tpu_custom_call.1} parent=51 // pred_check_branch
          %1789 = sbr.rel (%p1787) target = $region72
        $region71: #{tpu_custom_call.1} parent=51 // pred_region
          _
        $region72: #{tpu_custom_call.1} parent=51 // pred_fallthru
          _
      $region52: #{tpu_custom_call.1} parent=5 // pred_fallthru
        _
      %p1790 = scmp.le.s32.totalorder 2, %s17
      // Predicated region
      $region73: #{tpu_custom_call.1} parent=5 // pred_check
        %p1791 = pneg %p1790
      $region74: #{tpu_custom_call.1} parent=5 // pred_check_branch
        %1793 = sbr.rel (%p1791) target = $region76
      $region75: #{tpu_custom_call.1} parent=5 // pred_region
        %s1794 = ssub.s32 %s17, 2
        // Predicated region
        $region77: #{tpu_custom_call.1} parent=75 // pred_check
          %p1795 = pneg %p219
        $region78: #{tpu_custom_call.1} parent=75 // pred_check_branch
          %1797 = sbr.rel (%p1795) target = $region80
        $region79: #{tpu_custom_call.1} parent=75 // pred_region
          %p1798 = scmp.lt.s32.totalorder %s23, 1
          %s1799 = scalar_select %p1798, %s23, 1
          %s1800 = smul.addr %s1799, 64
          %s1801 = smul.addr %s1800, 8
          %s1802 = scalar_lea.vmem %s8, %s1801
        $region80: #{tpu_custom_call.1} parent=75 // pred_fallthru
          _
      $region76: #{tpu_custom_call.1} parent=5 // pred_fallthru
        _
    $region6: #{tpu_custom_call.1} parent=1 // loop_footer
      %s21 = sadd.s32 1, %s17
    $region7: #{tpu_custom_call.1} parent=1 // loop_footer_branch
      %16 = sbr.rel target = $region3
    $region8: #{tpu_custom_call.1} parent=1 // loop_exit
      _
    %1803 = vsyncpa [#allocation3], 1
    %s1804 = scalar_lea.sflag [#allocation3], 1
    %1805 = vsyncpa %s1804, 1
    %1806 = vsyncpa [#allocation5], 1
    %1807 = vsyncpa [#allocation8], 1

</llo_original>
